<compile_context>
chip_gen: v7x
topology: tpu7x:2x2x1
jax: 0.10.0
libtpu: 0.0.40
codegen_flags: <defaults>
</compile_context>

<pallas_src>
from functools import partial

import jax
import jax.numpy as jnp
from jax.experimental import pallas as pl
from jax.experimental.pallas import tpu as pltpu

LN_EPS = 1e-12  # matches LayerNorm(d_model, eps=1e-12) in the reference


def _row_tile(m):
    # Row tile: multiple of 8, <= 256, divides M, and gives >= 2 grid steps when
    # possible so both TensorCores on v7x get work.
    for t in (256, 128, 64, 32, 16, 8):
        if m % t == 0 and m // t >= 2:
            return t
    return m


# --------------------------- fused QKV projection ---------------------------

def _proj_kernel(x_ref, w_ref, b_ref, o_ref):
    x = x_ref[...].astype(jnp.bfloat16)                       # bf16 into MXU
    y = jnp.dot(x, w_ref[...], preferred_element_type=jnp.float32) + b_ref[...]
    o_ref[...] = y.astype(o_ref.dtype)


def qkv_proj(x2d, w_bf16, b_f32):
    M, D = x2d.shape
    N = w_bf16.shape[1]
    tm = _row_tile(M)
    return pl.pallas_call(
        _proj_kernel,
        out_shape=jax.ShapeDtypeStruct((M, N), jnp.bfloat16),
        grid=(M // tm,),
        in_specs=[pl.BlockSpec((tm, D), lambda i: (i, 0)),
                  pl.BlockSpec((D, N), lambda i: (0, 0)),
                  pl.BlockSpec((1, N), lambda i: (0, 0))],
        out_specs=pl.BlockSpec((tm, N), lambda i: (i, 0)),
        compiler_params=pltpu.CompilerParams(
            dimension_semantics=("parallel",)),
    )(x2d, w_bf16, b_f32.reshape(1, N))


# ------------- fused attention + out-projection + residual + LN -------------

def _attn_kernel(q_ref, k_ref, v_ref, m_ref, wo_ref, bo_ref, res_ref,
                 g_ref, bln_ref, o_ref):
    q = q_ref[0]                                   # (H, S, dh) bf16
    k = k_ref[0]
    v = v_ref[0]
    dh = q.shape[-1]
    scale = 1.0 / jnp.sqrt(jnp.float32(dh))

    # scores for all heads of this batch at once
    s = jnp.einsum('hqd,hkd->hqk', q, k,
                   preferred_element_type=jnp.float32) * scale   # (H, Sq, Sk)

    # padding mask: compressed (1, 1, Sk) vector, broadcast in-kernel
    mask = jnp.broadcast_to(m_ref[...], s.shape)
    s = jnp.where(mask == 0.0, jnp.float32(-10000.0), s)

    # softmax (f32), divide moved to the EUP via approx reciprocal
    s = s - jnp.max(s, axis=-1, keepdims=True)
    p = jnp.exp(s)
    p = p * pl.reciprocal(jnp.sum(p, axis=-1, keepdims=True), approx=True)

    # attention output per head, then fused output projection:
    # per-head Wo slab (dh, D), summed over heads == concat(heads) @ Wo
    o = jnp.einsum('hqk,hkd->hqd', p.astype(v.dtype), v,
                   preferred_element_type=jnp.float32)            # (H, S, dh)
    proj = jnp.einsum('hqd,hde->hqe', o.astype(jnp.bfloat16), wo_ref[...],
                      preferred_element_type=jnp.float32)         # (H, S, D)
    y = jnp.sum(proj, axis=0) + bo_ref[...] + res_ref[0]          # residual add

    # LayerNorm (biased variance, eps=1e-12), f32
    mean = jnp.mean(y, axis=-1, keepdims=True)
    var = jnp.mean((y - mean) ** 2, axis=-1, keepdims=True)
    yn = (y - mean) * jax.lax.rsqrt(var + LN_EPS)
    o_ref[0] = yn * g_ref[...] + bln_ref[...]


def attention_block(q, k, v, mask_vec, wo3, bo, res, gamma, beta):
    B, H, S, dh = q.shape
    D = H * dh
    return pl.pallas_call(
        _attn_kernel,
        out_shape=jax.ShapeDtypeStruct((B, S, D), jnp.float32),
        grid=(B,),
        in_specs=[pl.BlockSpec((1, H, S, dh), lambda b: (b, 0, 0, 0)),
                  pl.BlockSpec((1, H, S, dh), lambda b: (b, 0, 0, 0)),
                  pl.BlockSpec((1, H, S, dh), lambda b: (b, 0, 0, 0)),
                  pl.BlockSpec((1, 1, S), lambda b: (b, 0, 0)),
                  pl.BlockSpec((H, dh, D), lambda b: (0, 0, 0)),
                  pl.BlockSpec((1, D), lambda b: (0, 0)),
                  pl.BlockSpec((1, S, D), lambda b: (b, 0, 0)),
                  pl.BlockSpec((1, D), lambda b: (0, 0)),
                  pl.BlockSpec((1, D), lambda b: (0, 0))],
        out_specs=pl.BlockSpec((1, S, D), lambda b: (b, 0, 0)),
        compiler_params=pltpu.CompilerParams(
            dimension_semantics=("parallel",)),
    )(q, k, v, mask_vec, wo3, bo.reshape(1, D), res,
      gamma.reshape(1, D), beta.reshape(1, D))


# ------------------------ fused FFN + residual + LN -------------------------

def _ffn_ln_kernel(x_ref, w1_ref, b1_ref, w2_ref, b2_ref, g_ref, bln_ref, o_ref):
    x = x_ref[...]                                                # (tm, D) f32
    h = jnp.dot(x.astype(jnp.bfloat16), w1_ref[...],
                preferred_element_type=jnp.float32) + b1_ref[...]
    h = jnp.maximum(h, 0.0)                                       # ReLU
    y = jnp.dot(h.astype(jnp.bfloat16), w2_ref[...],
                preferred_element_type=jnp.float32) + b2_ref[...]
    y = y + x                                                     # residual
    mean = jnp.mean(y, axis=-1, keepdims=True)
    var = jnp.mean((y - mean) ** 2, axis=-1, keepdims=True)
    yn = (y - mean) * jax.lax.rsqrt(var + LN_EPS)
    o_ref[...] = yn * g_ref[...] + bln_ref[...]


def ffn_ln(x2d, w1, b1, w2, b2, gamma, beta):
    M, D = x2d.shape
    Hff = w1.shape[1]
    tm = _row_tile(M)
    return pl.pallas_call(
        _ffn_ln_kernel,
        out_shape=jax.ShapeDtypeStruct((M, D), jnp.float32),
        grid=(M // tm,),
        in_specs=[pl.BlockSpec((tm, D), lambda i: (i, 0)),
                  pl.BlockSpec((D, Hff), lambda i: (0, 0)),
                  pl.BlockSpec((1, Hff), lambda i: (0, 0)),
                  pl.BlockSpec((Hff, D), lambda i: (0, 0)),
                  pl.BlockSpec((1, D), lambda i: (0, 0)),
                  pl.BlockSpec((1, D), lambda i: (0, 0)),
                  pl.BlockSpec((1, D), lambda i: (0, 0))],
        out_specs=pl.BlockSpec((tm, D), lambda i: (i, 0)),
        compiler_params=pltpu.CompilerParams(
            dimension_semantics=("parallel",)),
    )(x2d, w1, b1.reshape(1, Hff), w2, b2.reshape(1, D),
      gamma.reshape(1, D), beta.reshape(1, D))


# ------------------------------ model (glue) --------------------------------

def encoder_layer(x, mask_vec, p, n_head):
    B, S, D = x.shape
    dh = D // n_head
    # fused QKV projection (one matmul), bf16 output feeds attention directly
    qkv = qkv_proj(x.reshape(-1, D), p["wqkv"], p["bqkv"])        # (B*S, 3D)
    # head split (plain-JAX glue, layout plumbing only)
    qkv = qkv.reshape(B, S, 3, n_head, dh).transpose(2, 0, 3, 1, 4)
    q, k, v = qkv[0], qkv[1], qkv[2]                              # (B, H, S, dh)
    # fused self-attention + out-proj + residual + LN1
    x = attention_block(q, k, v, mask_vec, p["wo3"], p["bo"], x,
                        p["ln1_g"], p["ln1_b"])
    # fused FFN + residual + LN2
    x2d = ffn_ln(x.reshape(-1, D), p["ffn_w1"], p["ffn_b1"],
                 p["ffn_w2"], p["ffn_b2"], p["ln2_g"], p["ln2_b"])
    return x2d.reshape(B, S, D)


@partial(jax.jit, static_argnums=(3,))
def encoder_forward(params, src_tokens, s_mask, n_head):
    B, S = src_tokens.shape
    D = params["tok_emb"].shape[1]
    # TODO(synk): embedding gather stays in plain JAX (data-dependent gather,
    # no rectangular BlockSpec); dropout is the identity at inference.
    x = jnp.take(params["tok_emb"], src_tokens, axis=0) \
        + params["pos_enc"][:S][None, :, :]
    # compress the (B,1,1,S) padding mask ONCE, outside the layer loop
    mask_vec = s_mask.reshape(B, 1, S).astype(jnp.float32)
    for lp in params["layers"]:
        x = encoder_layer(x, mask_vec, lp, n_head)
    return x


# --------------------------- parameter init (det.) --------------------------

def sinusoidal_encoding(max_len, d_model):
    pos = jnp.arange(max_len, dtype=jnp.float32)[:, None]
    i2 = jnp.arange(0, d_model, 2, dtype=jnp.float32)[None, :]
    angle = pos / jnp.power(10000.0, i2 / d_model)
    pe = jnp.zeros((max_len, d_model), jnp.float32)
    pe = pe.at[:, 0::2].set(jnp.sin(angle))
    pe = pe.at[:, 1::2].set(jnp.cos(angle))
    return pe


def init_params(key, vocab, max_len, d_model, d_hid, n_head, n_layers):
    dh = d_model // n_head

    def lin(k, din, dout):
        kw, kb = jax.random.split(k)
        lim = 1.0 / (din ** 0.5)
        w = jax.random.uniform(kw, (din, dout), jnp.float32, -lim, lim)
        b = jax.random.uniform(kb, (dout,), jnp.float32, -lim, lim)
        return w, b

    keys = jax.random.split(key, n_layers + 1)
    tok_emb = jax.random.normal(keys[0], (vocab, d_model), jnp.float32)
    tok_emb = tok_emb.at[1].set(0.0)             # nn.Embedding(padding_idx=1)
    pos_enc = sinusoidal_encoding(max_len, d_model)

    layers = []
    for li in range(n_layers):
        lk = jax.random.split(keys[1 + li], 6)
        wq, bq = lin(lk[0], d_model, d_model)
        wk, bk = lin(lk[1], d_model, d_model)
        wv, bv = lin(lk[2], d_model, d_model)
        wo, bo = lin(lk[3], d_model, d_model)
        w1, b1 = lin(lk[4], d_model, d_hid)
        w2, b2 = lin(lk[5], d_hid, d_model)
        layers.append(dict(
            # fused QKV weight (D, 3D) in bf16; biases / LN params stay f32
            wqkv=jnp.concatenate([wq, wk, wv], axis=1).astype(jnp.bfloat16),
            bqkv=jnp.concatenate([bq, bk, bv], axis=0),
            # output projection stored as per-head slabs (H, dh, D) in bf16
            wo3=wo.reshape(n_head, dh, d_model).astype(jnp.bfloat16),
            bo=bo,
            ffn_w1=w1.astype(jnp.bfloat16), ffn_b1=b1,
            ffn_w2=w2.astype(jnp.bfloat16), ffn_b2=b2,
            ln1_g=jnp.ones((d_model,), jnp.float32),
            ln1_b=jnp.zeros((d_model,), jnp.float32),
            ln2_g=jnp.ones((d_model,), jnp.float32),
            ln2_b=jnp.zeros((d_model,), jnp.float32),
        ))
    return dict(tok_emb=tok_emb, pos_enc=pos_enc, layers=layers)


# ----------------------------------- main ------------------------------------

if __name__ == "__main__":
    enc_voc_size, max_len, d_model, d_hid, n_head, n_layers = 64, 16, 32, 64, 4, 2
    B, src_len = 2, 8

    key = jax.random.PRNGKey(0)
    k_param, k_tok = jax.random.split(key)

    params = init_params(k_param, enc_voc_size, max_len, d_model,
                         d_hid, n_head, n_layers)

    src = jax.random.randint(k_tok, (B, src_len), 0, enc_voc_size)   # token ids
    s_mask = jnp.ones((B, 1, 1, src_len), jnp.float32)               # padding mask
    s_mask = s_mask.at[1, :, :, -2:].set(0.0)                        # pad tail of batch 1

    out = encoder_forward(params, src, s_mask, n_head)
    out = jax.block_until_ready(out)
    assert out.shape == (B, src_len, d_model)
    assert bool(jnp.all(jnp.isfinite(out)))
    print("KERNEL_OK")
</pallas_src>

<mosaic_0001>
module attributes {stable_mosaic.version = 11 : i64} {
  func.func @_proj_kernel(%arg0: i32, %arg1: memref<8x32xf32, #tpu.memory_space<vmem>>, %arg2: memref<32x96xbf16, #tpu.memory_space<vmem>>, %arg3: memref<1x96xf32, #tpu.memory_space<vmem>>, %arg4: memref<8x96xbf16, #tpu.memory_space<vmem>>) attributes {dimension_semantics = [#tpu.dimension_semantics<parallel>], iteration_bounds = array<i64: 2>, scalar_prefetch = 0 : i64, scratch_operands = 0 : i64, tpu.core_type = #tpu.core_type<tc>, window_params = [{transform_indices = @transform_0, window_bounds = array<i64: 8, 32>}, {pipeline_mode = #tpu.pipeline_mode<synchronous>, transform_indices = @transform_1, window_bounds = array<i64: 32, 96>}, {pipeline_mode = #tpu.pipeline_mode<synchronous>, transform_indices = @transform_2, window_bounds = array<i64: 1, 96>}, {transform_indices = @transform_3, window_bounds = array<i64: 8, 96>}]} {
    %c0 = arith.constant 0 : index
    %c0_0 = arith.constant 0 : index
    %0 = vector.load %arg1[%c0, %c0_0] : memref<8x32xf32, #tpu.memory_space<vmem>>, vector<8x32xf32>
    %1 = arith.truncf %0 : vector<8x32xf32> to vector<8x32xbf16>
    %c0_1 = arith.constant 0 : index
    %c0_2 = arith.constant 0 : index
    %2 = vector.load %arg2[%c0_1, %c0_2] : memref<32x96xbf16, #tpu.memory_space<vmem>>, vector<32x96xbf16>
    %cst = arith.constant dense<0.000000e+00> : vector<8x96xf32>
    %3 = tpu.matmul %1, %2, %cst {dimension_numbers = #tpu.dot_dimension_numbers<[1], [0], [0], [1], [0, 0, 1, 1], [], []>} : vector<8x32xbf16>, vector<32x96xbf16>, vector<8x96xf32> -> vector<8x96xf32>
    %c0_3 = arith.constant 0 : index
    %c0_4 = arith.constant 0 : index
    %4 = vector.load %arg3[%c0_3, %c0_4] : memref<1x96xf32, #tpu.memory_space<vmem>>, vector<1x96xf32>
    %5 = vector.broadcast %4 : vector<1x96xf32> to vector<8x96xf32>
    %6 = arith.addf %3, %5 : vector<8x96xf32>
    %7 = arith.truncf %6 : vector<8x96xf32> to vector<8x96xbf16>
    %c0_5 = arith.constant 0 : index
    %c0_6 = arith.constant 0 : index
    %8 = vector.load %arg4[%c0_5, %c0_6] : memref<8x96xbf16, #tpu.memory_space<vmem>>, vector<8x96xbf16>
    tpu.vector_store %arg4[%c0_5, %c0_6], %7 {strides = array<i32>} : memref<8x96xbf16, #tpu.memory_space<vmem>>, vector<8x96xbf16>,
    return
  }
  func.func @transform_0(%arg0: i32) -> (i32, i32) {
    %c0_i32 = arith.constant 0 : i32
    %c0_i32_0 = arith.constant 0 : i32
    return %arg0, %c0_i32 : i32, i32
  }
  func.func @transform_1(%arg0: i32) -> (i32, i32) {
    %c0_i32 = arith.constant 0 : i32
    %c0_i32_0 = arith.constant 0 : i32
    %c0_i32_1 = arith.constant 0 : i32
    return %c0_i32, %c0_i32_0 : i32, i32
  }
  func.func @transform_2(%arg0: i32) -> (i32, i32) {
    %c0_i32 = arith.constant 0 : i32
    %c0_i32_0 = arith.constant 0 : i32
    %c0_i32_1 = arith.constant 0 : i32
    return %c0_i32, %c0_i32_0 : i32, i32
  }
  func.func @transform_3(%arg0: i32) -> (i32, i32) {
    %c0_i32 = arith.constant 0 : i32
    %c0_i32_0 = arith.constant 0 : i32
    return %arg0, %c0_i32 : i32, i32
  }
}

module attributes {stable_mosaic.version = 11 : i64} {
  func.func @_attn_kernel(%arg0: i32, %arg1: memref<1x4x8x8xbf16, #tpu.memory_space<vmem>>, %arg2: memref<1x4x8x8xbf16, #tpu.memory_space<vmem>>, %arg3: memref<1x4x8x8xbf16, #tpu.memory_space<vmem>>, %arg4: memref<1x1x8xf32, #tpu.memory_space<vmem>>, %arg5: memref<4x8x32xbf16, #tpu.memory_space<vmem>>, %arg6: memref<1x32xf32, #tpu.memory_space<vmem>>, %arg7: memref<1x8x32xf32, #tpu.memory_space<vmem>>, %arg8: memref<1x32xf32, #tpu.memory_space<vmem>>, %arg9: memref<1x32xf32, #tpu.memory_space<vmem>>, %arg10: memref<1x8x32xf32, #tpu.memory_space<vmem>>) attributes {dimension_semantics = [#tpu.dimension_semantics<parallel>], iteration_bounds = array<i64: 2>, scalar_prefetch = 0 : i64, scratch_operands = 0 : i64, tpu.core_type = #tpu.core_type<tc>, window_params = [{transform_indices = @transform_0, window_bounds = array<i64: 1, 4, 8, 8>}, {transform_indices = @transform_1, window_bounds = array<i64: 1, 4, 8, 8>}, {transform_indices = @transform_2, window_bounds = array<i64: 1, 4, 8, 8>}, {transform_indices = @transform_3, window_bounds = array<i64: 1, 1, 8>}, {pipeline_mode = #tpu.pipeline_mode<synchronous>, transform_indices = @transform_4, window_bounds = array<i64: 4, 8, 32>}, {pipeline_mode = #tpu.pipeline_mode<synchronous>, transform_indices = @transform_5, window_bounds = array<i64: 1, 32>}, {transform_indices = @transform_6, window_bounds = array<i64: 1, 8, 32>}, {pipeline_mode = #tpu.pipeline_mode<synchronous>, transform_indices = @transform_7, window_bounds = array<i64: 1, 32>}, {pipeline_mode = #tpu.pipeline_mode<synchronous>, transform_indices = @transform_8, window_bounds = array<i64: 1, 32>}, {transform_indices = @transform_9, window_bounds = array<i64: 1, 8, 32>}]} {
    %c0 = arith.constant 0 : index
    %c0_0 = arith.constant 0 : index
    %c0_1 = arith.constant 0 : index
    %c0_2 = arith.constant 0 : index
    %0 = vector.load %arg1[%c0, %c0_0, %c0_1, %c0_2] : memref<1x4x8x8xbf16, #tpu.memory_space<vmem>>, vector<1x4x8x8xbf16>
    %1 = vector.shape_cast %0 : vector<1x4x8x8xbf16> to vector<4x8x8xbf16>
    %c0_3 = arith.constant 0 : index
    %c0_4 = arith.constant 0 : index
    %c0_5 = arith.constant 0 : index
    %c0_6 = arith.constant 0 : index
    %2 = vector.load %arg2[%c0_3, %c0_4, %c0_5, %c0_6] : memref<1x4x8x8xbf16, #tpu.memory_space<vmem>>, vector<1x4x8x8xbf16>
    %3 = vector.shape_cast %2 : vector<1x4x8x8xbf16> to vector<4x8x8xbf16>
    %c0_7 = arith.constant 0 : index
    %c0_8 = arith.constant 0 : index
    %c0_9 = arith.constant 0 : index
    %c0_10 = arith.constant 0 : index
    %4 = vector.load %arg3[%c0_7, %c0_8, %c0_9, %c0_10] : memref<1x4x8x8xbf16, #tpu.memory_space<vmem>>, vector<1x4x8x8xbf16>
    %5 = vector.shape_cast %4 : vector<1x4x8x8xbf16> to vector<4x8x8xbf16>
    %cst = arith.constant 8.000000e+00 : f32
    %6 = math.sqrt %cst : f32
    %cst_11 = arith.constant 1.000000e+00 : f32
    %7 = arith.divf %cst_11, %6 : f32
    "tpu.trace_start"() <{level = 10 : i32, message = "hqd,hkd->hqk"}> : () -> ()
    %cst_12 = arith.constant dense<0.000000e+00> : vector<4x8x8xf32>
    %8 = tpu.matmul %1, %3, %cst_12 {dimension_numbers = #tpu.dot_dimension_numbers<[2], [2], [1], [1], [0, 0, 0, 1, 1, 1], [0], [0]>} : vector<4x8x8xbf16>, vector<4x8x8xbf16>, vector<4x8x8xf32> -> vector<4x8x8xf32>
    "tpu.trace_stop"() : () -> ()
    %9 = vector.broadcast %7 : f32 to vector<4x8x8xf32>
    %10 = arith.mulf %8, %9 : vector<4x8x8xf32>
    %c0_13 = arith.constant 0 : index
    %c0_14 = arith.constant 0 : index
    %c0_15 = arith.constant 0 : index
    %11 = vector.load %arg4[%c0_13, %c0_14, %c0_15] : memref<1x1x8xf32, #tpu.memory_space<vmem>>, vector<1x1x8xf32>
    %12 = vector.shape_cast %11 : vector<1x1x8xf32> to vector<1x1x8xf32>
    %13 = vector.broadcast %12 : vector<1x1x8xf32> to vector<4x8x8xf32>
    %cst_16 = arith.constant 0.000000e+00 : f32
    %14 = vector.broadcast %cst_16 : f32 to vector<4x8x8xf32>
    %15 = arith.cmpf oeq, %13, %14 : vector<4x8x8xf32>
    %cst_17 = arith.constant -1.000000e+04 : f32
    %16 = vector.broadcast %cst_17 : f32 to vector<4x8x8xf32>
    %17 = arith.select %15, %16, %10 : vector<4x8x8xi1>, vector<4x8x8xf32>
    %cst_18 = arith.constant dense<0xFF800000> : vector<4x8xf32>
    %18 = vector.multi_reduction <maximumf>, %17, %cst_18 [2] : vector<4x8x8xf32> to vector<4x8xf32>
    %19 = vector.shape_cast %18 : vector<4x8xf32> to vector<4x8x1xf32>
    %20 = vector.broadcast %19 : vector<4x8x1xf32> to vector<4x8x8xf32>
    %21 = arith.subf %17, %20 : vector<4x8x8xf32>
    %22 = math.exp %21 : vector<4x8x8xf32>
    %cst_19 = arith.constant dense<0.000000e+00> : vector<4x8xf32>
    %23 = vector.multi_reduction <add>, %22, %cst_19 [2] : vector<4x8x8xf32> to vector<4x8xf32>
    %24 = vector.shape_cast %23 : vector<4x8xf32> to vector<4x8x1xf32>
    %25 = tpu.reciprocal %24 {approx = true} : vector<4x8x1xf32> -> vector<4x8x1xf32>
    %26 = vector.broadcast %25 : vector<4x8x1xf32> to vector<4x8x8xf32>
    %27 = arith.mulf %22, %26 : vector<4x8x8xf32>
    %28 = arith.truncf %27 : vector<4x8x8xf32> to vector<4x8x8xbf16>
    "tpu.trace_start"() <{level = 10 : i32, message = "hqk,hkd->hqd"}> : () -> ()
    %cst_20 = arith.constant dense<0.000000e+00> : vector<4x8x8xf32>
    %29 = tpu.matmul %28, %5, %cst_20 {dimension_numbers = #tpu.dot_dimension_numbers<[2], [1], [1], [2], [0, 0, 0, 1, 1, 2], [0], [0]>} : vector<4x8x8xbf16>, vector<4x8x8xbf16>, vector<4x8x8xf32> -> vector<4x8x8xf32>
    "tpu.trace_stop"() : () -> ()
    %30 = arith.truncf %29 : vector<4x8x8xf32> to vector<4x8x8xbf16>
    %c0_21 = arith.constant 0 : index
    %c0_22 = arith.constant 0 : index
    %c0_23 = arith.constant 0 : index
    %31 = vector.load %arg5[%c0_21, %c0_22, %c0_23] : memref<4x8x32xbf16, #tpu.memory_space<vmem>>, vector<4x8x32xbf16>
    "tpu.trace_start"() <{level = 10 : i32, message = "hqd,hde->hqe"}> : () -> ()
    %cst_24 = arith.constant dense<0.000000e+00> : vector<4x8x32xf32>
    %32 = tpu.matmul %30, %31, %cst_24 {dimension_numbers = #tpu.dot_dimension_numbers<[2], [1], [1], [2], [0, 0, 0, 1, 1, 2], [0], [0]>} : vector<4x8x8xbf16>, vector<4x8x32xbf16>, vector<4x8x32xf32> -> vector<4x8x32xf32>
    "tpu.trace_stop"() : () -> ()
    %cst_25 = arith.constant dense<0.000000e+00> : vector<8x32xf32>
    %33 = vector.multi_reduction <add>, %32, %cst_25 [0] : vector<4x8x32xf32> to vector<8x32xf32>
    %c0_26 = arith.constant 0 : index
    %c0_27 = arith.constant 0 : index
    %34 = vector.load %arg6[%c0_26, %c0_27] : memref<1x32xf32, #tpu.memory_space<vmem>>, vector<1x32xf32>
    %35 = vector.broadcast %34 : vector<1x32xf32> to vector<8x32xf32>
    %36 = arith.addf %33, %35 : vector<8x32xf32>
    %c0_28 = arith.constant 0 : index
    %c0_29 = arith.constant 0 : index
    %c0_30 = arith.constant 0 : index
    %37 = vector.load %arg7[%c0_28, %c0_29, %c0_30] : memref<1x8x32xf32, #tpu.memory_space<vmem>>, vector<1x8x32xf32>
    %38 = vector.shape_cast %37 : vector<1x8x32xf32> to vector<8x32xf32>
    %39 = arith.addf %36, %38 : vector<8x32xf32>
    %cst_31 = arith.constant dense<0.000000e+00> : vector<8xf32>
    %40 = vector.multi_reduction <add>, %39, %cst_31 [1] : vector<8x32xf32> to vector<8xf32>
    %41 = vector.shape_cast %40 : vector<8xf32> to vector<8x1xf32>
    %cst_32 = arith.constant 3.200000e+01 : f32
    %42 = vector.broadcast %cst_32 : f32 to vector<8x1xf32>
    %43 = arith.divf %41, %42 : vector<8x1xf32>
    %44 = vector.broadcast %43 : vector<8x1xf32> to vector<8x32xf32>
    %45 = arith.subf %39, %44 : vector<8x32xf32>
    %46 = arith.mulf %45, %45 : vector<8x32xf32>
    %cst_33 = arith.constant dense<0.000000e+00> : vector<8xf32>
    %47 = vector.multi_reduction <add>, %46, %cst_33 [1] : vector<8x32xf32> to vector<8xf32>
    %48 = vector.shape_cast %47 : vector<8xf32> to vector<8x1xf32>
    %cst_34 = arith.constant 3.200000e+01 : f32
    %49 = vector.broadcast %cst_34 : f32 to vector<8x1xf32>
    %50 = arith.divf %48, %49 : vector<8x1xf32>
    %51 = vector.broadcast %43 : vector<8x1xf32> to vector<8x32xf32>
    %52 = arith.subf %39, %51 : vector<8x32xf32>
    %cst_35 = arith.constant 9.99999996E-13 : f32
    %53 = vector.broadcast %cst_35 : f32 to vector<8x1xf32>
    %54 = arith.addf %50, %53 : vector<8x1xf32>
    %55 = math.rsqrt %54 : vector<8x1xf32>
    %56 = vector.broadcast %55 : vector<8x1xf32> to vector<8x32xf32>
    %57 = arith.mulf %52, %56 : vector<8x32xf32>
    %c0_36 = arith.constant 0 : index
    %c0_37 = arith.constant 0 : index
    %58 = vector.load %arg8[%c0_36, %c0_37] : memref<1x32xf32, #tpu.memory_space<vmem>>, vector<1x32xf32>
    %59 = vector.broadcast %58 : vector<1x32xf32> to vector<8x32xf32>
    %60 = arith.mulf %57, %59 : vector<8x32xf32>
    %c0_38 = arith.constant 0 : index
    %c0_39 = arith.constant 0 : index
    %61 = vector.load %arg9[%c0_38, %c0_39] : memref<1x32xf32, #tpu.memory_space<vmem>>, vector<1x32xf32>
    %62 = vector.broadcast %61 : vector<1x32xf32> to vector<8x32xf32>
    %63 = arith.addf %60, %62 : vector<8x32xf32>
    %c0_40 = arith.constant 0 : index
    %c0_41 = arith.constant 0 : index
    %c0_42 = arith.constant 0 : index
    %64 = vector.load %arg10[%c0_40, %c0_41, %c0_42] : memref<1x8x32xf32, #tpu.memory_space<vmem>>, vector<1x8x32xf32>
    %65 = vector.shape_cast %64 : vector<1x8x32xf32> to vector<8x32xf32>
    %66 = vector.shape_cast %63 : vector<8x32xf32> to vector<1x8x32xf32>
    tpu.vector_store %arg10[%c0_40, %c0_41, %c0_42], %66 {strides = array<i32>} : memref<1x8x32xf32, #tpu.memory_space<vmem>>, vector<1x8x32xf32>,
    return
  }
  func.func @transform_0(%arg0: i32) -> (i32, i32, i32, i32) {
    %c0_i32 = arith.constant 0 : i32
    %c0_i32_0 = arith.constant 0 : i32
    %c0_i32_1 = arith.constant 0 : i32
    %c0_i32_2 = arith.constant 0 : i32
    return %arg0, %c0_i32, %c0_i32_0, %c0_i32_1 : i32, i32, i32, i32
  }
  func.func @transform_1(%arg0: i32) -> (i32, i32, i32, i32) {
    %c0_i32 = arith.constant 0 : i32
    %c0_i32_0 = arith.constant 0 : i32
    %c0_i32_1 = arith.constant 0 : i32
    %c0_i32_2 = arith.constant 0 : i32
    return %arg0, %c0_i32, %c0_i32_0, %c0_i32_1 : i32, i32, i32, i32
  }
  func.func @transform_2(%arg0: i32) -> (i32, i32, i32, i32) {
    %c0_i32 = arith.constant 0 : i32
    %c0_i32_0 = arith.constant 0 : i32
    %c0_i32_1 = arith.constant 0 : i32
    %c0_i32_2 = arith.constant 0 : i32
    return %arg0, %c0_i32, %c0_i32_0, %c0_i32_1 : i32, i32, i32, i32
  }
  func.func @transform_3(%arg0: i32) -> (i32, i32, i32) {
    %c0_i32 = arith.constant 0 : i32
    %c0_i32_0 = arith.constant 0 : i32
    %c0_i32_1 = arith.constant 0 : i32
    return %arg0, %c0_i32, %c0_i32_0 : i32, i32, i32
  }
  func.func @transform_4(%arg0: i32) -> (i32, i32, i32) {
    %c0_i32 = arith.constant 0 : i32
    %c0_i32_0 = arith.constant 0 : i32
    %c0_i32_1 = arith.constant 0 : i32
    %c0_i32_2 = arith.constant 0 : i32
    return %c0_i32, %c0_i32_0, %c0_i32_1 : i32, i32, i32
  }
  func.func @transform_5(%arg0: i32) -> (i32, i32) {
    %c0_i32 = arith.constant 0 : i32
    %c0_i32_0 = arith.constant 0 : i32
    %c0_i32_1 = arith.constant 0 : i32
    return %c0_i32, %c0_i32_0 : i32, i32
  }
  func.func @transform_6(%arg0: i32) -> (i32, i32, i32) {
    %c0_i32 = arith.constant 0 : i32
    %c0_i32_0 = arith.constant 0 : i32
    %c0_i32_1 = arith.constant 0 : i32
    return %arg0, %c0_i32, %c0_i32_0 : i32, i32, i32
  }
  func.func @transform_7(%arg0: i32) -> (i32, i32) {
    %c0_i32 = arith.constant 0 : i32
    %c0_i32_0 = arith.constant 0 : i32
    %c0_i32_1 = arith.constant 0 : i32
    return %c0_i32, %c0_i32_0 : i32, i32
  }
  func.func @transform_8(%arg0: i32) -> (i32, i32) {
    %c0_i32 = arith.constant 0 : i32
    %c0_i32_0 = arith.constant 0 : i32
    %c0_i32_1 = arith.constant 0 : i32
    return %c0_i32, %c0_i32_0 : i32, i32
  }
  func.func @transform_9(%arg0: i32) -> (i32, i32, i32) {
    %c0_i32 = arith.constant 0 : i32
    %c0_i32_0 = arith.constant 0 : i32
    %c0_i32_1 = arith.constant 0 : i32
    return %arg0, %c0_i32, %c0_i32_0 : i32, i32, i32
  }
}

module attributes {stable_mosaic.version = 11 : i64} {
  func.func @_ffn_ln_kernel(%arg0: i32, %arg1: memref<8x32xf32, #tpu.memory_space<vmem>>, %arg2: memref<32x64xbf16, #tpu.memory_space<vmem>>, %arg3: memref<1x64xf32, #tpu.memory_space<vmem>>, %arg4: memref<64x32xbf16, #tpu.memory_space<vmem>>, %arg5: memref<1x32xf32, #tpu.memory_space<vmem>>, %arg6: memref<1x32xf32, #tpu.memory_space<vmem>>, %arg7: memref<1x32xf32, #tpu.memory_space<vmem>>, %arg8: memref<8x32xf32, #tpu.memory_space<vmem>>) attributes {dimension_semantics = [#tpu.dimension_semantics<parallel>], iteration_bounds = array<i64: 2>, scalar_prefetch = 0 : i64, scratch_operands = 0 : i64, tpu.core_type = #tpu.core_type<tc>, window_params = [{transform_indices = @transform_0, window_bounds = array<i64: 8, 32>}, {pipeline_mode = #tpu.pipeline_mode<synchronous>, transform_indices = @transform_1, window_bounds = array<i64: 32, 64>}, {pipeline_mode = #tpu.pipeline_mode<synchronous>, transform_indices = @transform_2, window_bounds = array<i64: 1, 64>}, {pipeline_mode = #tpu.pipeline_mode<synchronous>, transform_indices = @transform_3, window_bounds = array<i64: 64, 32>}, {pipeline_mode = #tpu.pipeline_mode<synchronous>, transform_indices = @transform_4, window_bounds = array<i64: 1, 32>}, {pipeline_mode = #tpu.pipeline_mode<synchronous>, transform_indices = @transform_5, window_bounds = array<i64: 1, 32>}, {pipeline_mode = #tpu.pipeline_mode<synchronous>, transform_indices = @transform_6, window_bounds = array<i64: 1, 32>}, {transform_indices = @transform_7, window_bounds = array<i64: 8, 32>}]} {
    %c0 = arith.constant 0 : index
    %c0_0 = arith.constant 0 : index
    %0 = vector.load %arg1[%c0, %c0_0] : memref<8x32xf32, #tpu.memory_space<vmem>>, vector<8x32xf32>
    %1 = arith.truncf %0 : vector<8x32xf32> to vector<8x32xbf16>
    %c0_1 = arith.constant 0 : index
    %c0_2 = arith.constant 0 : index
    %2 = vector.load %arg2[%c0_1, %c0_2] : memref<32x64xbf16, #tpu.memory_space<vmem>>, vector<32x64xbf16>
    %cst = arith.constant dense<0.000000e+00> : vector<8x64xf32>
    %3 = tpu.matmul %1, %2, %cst {dimension_numbers = #tpu.dot_dimension_numbers<[1], [0], [0], [1], [0, 0, 1, 1], [], []>} : vector<8x32xbf16>, vector<32x64xbf16>, vector<8x64xf32> -> vector<8x64xf32>
    %c0_3 = arith.constant 0 : index
    %c0_4 = arith.constant 0 : index
    %4 = vector.load %arg3[%c0_3, %c0_4] : memref<1x64xf32, #tpu.memory_space<vmem>>, vector<1x64xf32>
    %5 = vector.broadcast %4 : vector<1x64xf32> to vector<8x64xf32>
    %6 = arith.addf %3, %5 : vector<8x64xf32>
    %cst_5 = arith.constant 0.000000e+00 : f32
    %7 = vector.broadcast %cst_5 : f32 to vector<8x64xf32>
    %8 = arith.maximumf %6, %7 : vector<8x64xf32>
    %9 = arith.truncf %8 : vector<8x64xf32> to vector<8x64xbf16>
    %c0_6 = arith.constant 0 : index
    %c0_7 = arith.constant 0 : index
    %10 = vector.load %arg4[%c0_6, %c0_7] : memref<64x32xbf16, #tpu.memory_space<vmem>>, vector<64x32xbf16>
    %cst_8 = arith.constant dense<0.000000e+00> : vector<8x32xf32>
    %11 = tpu.matmul %9, %10, %cst_8 {dimension_numbers = #tpu.dot_dimension_numbers<[1], [0], [0], [1], [0, 0, 1, 1], [], []>} : vector<8x64xbf16>, vector<64x32xbf16>, vector<8x32xf32> -> vector<8x32xf32>
    %c0_9 = arith.constant 0 : index
    %c0_10 = arith.constant 0 : index
    %12 = vector.load %arg5[%c0_9, %c0_10] : memref<1x32xf32, #tpu.memory_space<vmem>>, vector<1x32xf32>
    %13 = vector.broadcast %12 : vector<1x32xf32> to vector<8x32xf32>
    %14 = arith.addf %11, %13 : vector<8x32xf32>
    %15 = arith.addf %14, %0 : vector<8x32xf32>
    %cst_11 = arith.constant dense<0.000000e+00> : vector<8xf32>
    %16 = vector.multi_reduction <add>, %15, %cst_11 [1] : vector<8x32xf32> to vector<8xf32>
    %17 = vector.shape_cast %16 : vector<8xf32> to vector<8x1xf32>
    %cst_12 = arith.constant 3.200000e+01 : f32
    %18 = vector.broadcast %cst_12 : f32 to vector<8x1xf32>
    %19 = arith.divf %17, %18 : vector<8x1xf32>
    %20 = vector.broadcast %19 : vector<8x1xf32> to vector<8x32xf32>
    %21 = arith.subf %15, %20 : vector<8x32xf32>
    %22 = arith.mulf %21, %21 : vector<8x32xf32>
    %cst_13 = arith.constant dense<0.000000e+00> : vector<8xf32>
    %23 = vector.multi_reduction <add>, %22, %cst_13 [1] : vector<8x32xf32> to vector<8xf32>
    %24 = vector.shape_cast %23 : vector<8xf32> to vector<8x1xf32>
    %cst_14 = arith.constant 3.200000e+01 : f32
    %25 = vector.broadcast %cst_14 : f32 to vector<8x1xf32>
    %26 = arith.divf %24, %25 : vector<8x1xf32>
    %27 = vector.broadcast %19 : vector<8x1xf32> to vector<8x32xf32>
    %28 = arith.subf %15, %27 : vector<8x32xf32>
    %cst_15 = arith.constant 9.99999996E-13 : f32
    %29 = vector.broadcast %cst_15 : f32 to vector<8x1xf32>
    %30 = arith.addf %26, %29 : vector<8x1xf32>
    %31 = math.rsqrt %30 : vector<8x1xf32>
    %32 = vector.broadcast %31 : vector<8x1xf32> to vector<8x32xf32>
    %33 = arith.mulf %28, %32 : vector<8x32xf32>
    %c0_16 = arith.constant 0 : index
    %c0_17 = arith.constant 0 : index
    %34 = vector.load %arg6[%c0_16, %c0_17] : memref<1x32xf32, #tpu.memory_space<vmem>>, vector<1x32xf32>
    %35 = vector.broadcast %34 : vector<1x32xf32> to vector<8x32xf32>
    %36 = arith.mulf %33, %35 : vector<8x32xf32>
    %c0_18 = arith.constant 0 : index
    %c0_19 = arith.constant 0 : index
    %37 = vector.load %arg7[%c0_18, %c0_19] : memref<1x32xf32, #tpu.memory_space<vmem>>, vector<1x32xf32>
    %38 = vector.broadcast %37 : vector<1x32xf32> to vector<8x32xf32>
    %39 = arith.addf %36, %38 : vector<8x32xf32>
    %c0_20 = arith.constant 0 : index
    %c0_21 = arith.constant 0 : index
    %40 = vector.load %arg8[%c0_20, %c0_21] : memref<8x32xf32, #tpu.memory_space<vmem>>, vector<8x32xf32>
    tpu.vector_store %arg8[%c0_20, %c0_21], %39 {strides = array<i32>} : memref<8x32xf32, #tpu.memory_space<vmem>>, vector<8x32xf32>,
    return
  }
  func.func @transform_0(%arg0: i32) -> (i32, i32) {
    %c0_i32 = arith.constant 0 : i32
    %c0_i32_0 = arith.constant 0 : i32
    return %arg0, %c0_i32 : i32, i32
  }
  func.func @transform_1(%arg0: i32) -> (i32, i32) {
    %c0_i32 = arith.constant 0 : i32
    %c0_i32_0 = arith.constant 0 : i32
    %c0_i32_1 = arith.constant 0 : i32
    return %c0_i32, %c0_i32_0 : i32, i32
  }
  func.func @transform_2(%arg0: i32) -> (i32, i32) {
    %c0_i32 = arith.constant 0 : i32
    %c0_i32_0 = arith.constant 0 : i32
    %c0_i32_1 = arith.constant 0 : i32
    return %c0_i32, %c0_i32_0 : i32, i32
  }
  func.func @transform_3(%arg0: i32) -> (i32, i32) {
    %c0_i32 = arith.constant 0 : i32
    %c0_i32_0 = arith.constant 0 : i32
    %c0_i32_1 = arith.constant 0 : i32
    return %c0_i32, %c0_i32_0 : i32, i32
  }
  func.func @transform_4(%arg0: i32) -> (i32, i32) {
    %c0_i32 = arith.constant 0 : i32
    %c0_i32_0 = arith.constant 0 : i32
    %c0_i32_1 = arith.constant 0 : i32
    return %c0_i32, %c0_i32_0 : i32, i32
  }
  func.func @transform_5(%arg0: i32) -> (i32, i32) {
    %c0_i32 = arith.constant 0 : i32
    %c0_i32_0 = arith.constant 0 : i32
    %c0_i32_1 = arith.constant 0 : i32
    return %c0_i32, %c0_i32_0 : i32, i32
  }
  func.func @transform_6(%arg0: i32) -> (i32, i32) {
    %c0_i32 = arith.constant 0 : i32
    %c0_i32_0 = arith.constant 0 : i32
    %c0_i32_1 = arith.constant 0 : i32
    return %c0_i32, %c0_i32_0 : i32, i32
  }
  func.func @transform_7(%arg0: i32) -> (i32, i32) {
    %c0_i32 = arith.constant 0 : i32
    %c0_i32_0 = arith.constant 0 : i32
    return %arg0, %c0_i32 : i32, i32
  }
}

module attributes {stable_mosaic.version = 11 : i64} {
  func.func @_ffn_ln_kernel(%arg0: i32, %arg1: memref<8x32xf32, #tpu.memory_space<vmem>>, %arg2: memref<32x64xbf16, #tpu.memory_space<vmem>>, %arg3: memref<1x64xf32, #tpu.memory_space<vmem>>, %arg4: memref<64x32xbf16, #tpu.memory_space<vmem>>, %arg5: memref<1x32xf32, #tpu.memory_space<vmem>>, %arg6: memref<1x32xf32, #tpu.memory_space<vmem>>, %arg7: memref<1x32xf32, #tpu.memory_space<vmem>>, %arg8: memref<8x32xf32, #tpu.memory_space<vmem>>) attributes {dimension_semantics = [#tpu.dimension_semantics<parallel>], iteration_bounds = array<i64: 2>, scalar_prefetch = 0 : i64, scratch_operands = 0 : i64, tpu.core_type = #tpu.core_type<tc>, window_params = [{transform_indices = @transform_0, window_bounds = array<i64: 8, 32>}, {pipeline_mode = #tpu.pipeline_mode<synchronous>, transform_indices = @transform_1, window_bounds = array<i64: 32, 64>}, {pipeline_mode = #tpu.pipeline_mode<synchronous>, transform_indices = @transform_2, window_bounds = array<i64: 1, 64>}, {pipeline_mode = #tpu.pipeline_mode<synchronous>, transform_indices = @transform_3, window_bounds = array<i64: 64, 32>}, {pipeline_mode = #tpu.pipeline_mode<synchronous>, transform_indices = @transform_4, window_bounds = array<i64: 1, 32>}, {pipeline_mode = #tpu.pipeline_mode<synchronous>, transform_indices = @transform_5, window_bounds = array<i64: 1, 32>}, {pipeline_mode = #tpu.pipeline_mode<synchronous>, transform_indices = @transform_6, window_bounds = array<i64: 1, 32>}, {transform_indices = @transform_7, window_bounds = array<i64: 8, 32>}]} {
    %c0 = arith.constant 0 : index
    %c0_0 = arith.constant 0 : index
    %0 = vector.load %arg1[%c0, %c0_0] : memref<8x32xf32, #tpu.memory_space<vmem>>, vector<8x32xf32>
    %1 = arith.truncf %0 : vector<8x32xf32> to vector<8x32xbf16>
    %c0_1 = arith.constant 0 : index
    %c0_2 = arith.constant 0 : index
    %2 = vector.load %arg2[%c0_1, %c0_2] : memref<32x64xbf16, #tpu.memory_space<vmem>>, vector<32x64xbf16>
    %cst = arith.constant dense<0.000000e+00> : vector<8x64xf32>
    %3 = tpu.matmul %1, %2, %cst {dimension_numbers = #tpu.dot_dimension_numbers<[1], [0], [0], [1], [0, 0, 1, 1], [], []>} : vector<8x32xbf16>, vector<32x64xbf16>, vector<8x64xf32> -> vector<8x64xf32>
    %c0_3 = arith.constant 0 : index
    %c0_4 = arith.constant 0 : index
    %4 = vector.load %arg3[%c0_3, %c0_4] : memref<1x64xf32, #tpu.memory_space<vmem>>, vector<1x64xf32>
    %5 = vector.broadcast %4 : vector<1x64xf32> to vector<8x64xf32>
    %6 = arith.addf %3, %5 : vector<8x64xf32>
    %cst_5 = arith.constant 0.000000e+00 : f32
    %7 = vector.broadcast %cst_5 : f32 to vector<8x64xf32>
    %8 = arith.maximumf %6, %7 : vector<8x64xf32>
    %9 = arith.truncf %8 : vector<8x64xf32> to vector<8x64xbf16>
    %c0_6 = arith.constant 0 : index
    %c0_7 = arith.constant 0 : index
    %10 = vector.load %arg4[%c0_6, %c0_7] : memref<64x32xbf16, #tpu.memory_space<vmem>>, vector<64x32xbf16>
    %cst_8 = arith.constant dense<0.000000e+00> : vector<8x32xf32>
    %11 = tpu.matmul %9, %10, %cst_8 {dimension_numbers = #tpu.dot_dimension_numbers<[1], [0], [0], [1], [0, 0, 1, 1], [], []>} : vector<8x64xbf16>, vector<64x32xbf16>, vector<8x32xf32> -> vector<8x32xf32>
    %c0_9 = arith.constant 0 : index
    %c0_10 = arith.constant 0 : index
    %12 = vector.load %arg5[%c0_9, %c0_10] : memref<1x32xf32, #tpu.memory_space<vmem>>, vector<1x32xf32>
    %13 = vector.broadcast %12 : vector<1x32xf32> to vector<8x32xf32>
    %14 = arith.addf %11, %13 : vector<8x32xf32>
    %15 = arith.addf %14, %0 : vector<8x32xf32>
    %cst_11 = arith.constant dense<0.000000e+00> : vector<8xf32>
    %16 = vector.multi_reduction <add>, %15, %cst_11 [1] : vector<8x32xf32> to vector<8xf32>
    %17 = vector.shape_cast %16 : vector<8xf32> to vector<8x1xf32>
    %cst_12 = arith.constant 3.200000e+01 : f32
    %18 = vector.broadcast %cst_12 : f32 to vector<8x1xf32>
    %19 = arith.divf %17, %18 : vector<8x1xf32>
    %20 = vector.broadcast %19 : vector<8x1xf32> to vector<8x32xf32>
    %21 = arith.subf %15, %20 : vector<8x32xf32>
    %22 = arith.mulf %21, %21 : vector<8x32xf32>
    %cst_13 = arith.constant dense<0.000000e+00> : vector<8xf32>
    %23 = vector.multi_reduction <add>, %22, %cst_13 [1] : vector<8x32xf32> to vector<8xf32>
    %24 = vector.shape_cast %23 : vector<8xf32> to vector<8x1xf32>
    %cst_14 = arith.constant 3.200000e+01 : f32
    %25 = vector.broadcast %cst_14 : f32 to vector<8x1xf32>
    %26 = arith.divf %24, %25 : vector<8x1xf32>
    %27 = vector.broadcast %19 : vector<8x1xf32> to vector<8x32xf32>
    %28 = arith.subf %15, %27 : vector<8x32xf32>
    %cst_15 = arith.constant 9.99999996E-13 : f32
    %29 = vector.broadcast %cst_15 : f32 to vector<8x1xf32>
    %30 = arith.addf %26, %29 : vector<8x1xf32>
    %31 = math.rsqrt %30 : vector<8x1xf32>
    %32 = vector.broadcast %31 : vector<8x1xf32> to vector<8x32xf32>
    %33 = arith.mulf %28, %32 : vector<8x32xf32>
    %c0_16 = arith.constant 0 : index
    %c0_17 = arith.constant 0 : index
    %34 = vector.load %arg6[%c0_16, %c0_17] : memref<1x32xf32, #tpu.memory_space<vmem>>, vector<1x32xf32>
    %35 = vector.broadcast %34 : vector<1x32xf32> to vector<8x32xf32>
    %36 = arith.mulf %33, %35 : vector<8x32xf32>
    %c0_18 = arith.constant 0 : index
    %c0_19 = arith.constant 0 : index
    %37 = vector.load %arg7[%c0_18, %c0_19] : memref<1x32xf32, #tpu.memory_space<vmem>>, vector<1x32xf32>
    %38 = vector.broadcast %37 : vector<1x32xf32> to vector<8x32xf32>
    %39 = arith.addf %36, %38 : vector<8x32xf32>
    %c0_20 = arith.constant 0 : index
    %c0_21 = arith.constant 0 : index
    %40 = vector.load %arg8[%c0_20, %c0_21] : memref<8x32xf32, #tpu.memory_space<vmem>>, vector<8x32xf32>
    tpu.vector_store %arg8[%c0_20, %c0_21], %39 {strides = array<i32>} : memref<8x32xf32, #tpu.memory_space<vmem>>, vector<8x32xf32>,
    return
  }
  func.func @transform_0(%arg0: i32) -> (i32, i32) {
    %c0_i32 = arith.constant 0 : i32
    %c0_i32_0 = arith.constant 0 : i32
    return %arg0, %c0_i32 : i32, i32
  }
  func.func @transform_1(%arg0: i32) -> (i32, i32) {
    %c0_i32 = arith.constant 0 : i32
    %c0_i32_0 = arith.constant 0 : i32
    %c0_i32_1 = arith.constant 0 : i32
    return %c0_i32, %c0_i32_0 : i32, i32
  }
  func.func @transform_2(%arg0: i32) -> (i32, i32) {
    %c0_i32 = arith.constant 0 : i32
    %c0_i32_0 = arith.constant 0 : i32
    %c0_i32_1 = arith.constant 0 : i32
    return %c0_i32, %c0_i32_0 : i32, i32
  }
  func.func @transform_3(%arg0: i32) -> (i32, i32) {
    %c0_i32 = arith.constant 0 : i32
    %c0_i32_0 = arith.constant 0 : i32
    %c0_i32_1 = arith.constant 0 : i32
    return %c0_i32, %c0_i32_0 : i32, i32
  }
  func.func @transform_4(%arg0: i32) -> (i32, i32) {
    %c0_i32 = arith.constant 0 : i32
    %c0_i32_0 = arith.constant 0 : i32
    %c0_i32_1 = arith.constant 0 : i32
    return %c0_i32, %c0_i32_0 : i32, i32
  }
  func.func @transform_5(%arg0: i32) -> (i32, i32) {
    %c0_i32 = arith.constant 0 : i32
    %c0_i32_0 = arith.constant 0 : i32
    %c0_i32_1 = arith.constant 0 : i32
    return %c0_i32, %c0_i32_0 : i32, i32
  }
  func.func @transform_6(%arg0: i32) -> (i32, i32) {
    %c0_i32 = arith.constant 0 : i32
    %c0_i32_0 = arith.constant 0 : i32
    %c0_i32_1 = arith.constant 0 : i32
    return %c0_i32, %c0_i32_0 : i32, i32
  }
  func.func @transform_7(%arg0: i32) -> (i32, i32) {
    %c0_i32 = arith.constant 0 : i32
    %c0_i32_0 = arith.constant 0 : i32
    return %arg0, %c0_i32 : i32, i32
  }
}

</mosaic_0001>

<llo_original>
// kernel: encoder_forward.6
$region0: #{encoder_forward.6}
  #allocation0 [shape = 'u32[]', space=smem, size = 0x4, offset = 0x4, fixed_abs, tag = 'smem constant byte address 0x4 - core index']
  #allocation1 [shape = 'u32[144,128]{1,0:T(1,128)}', space=vmem, size = 0x12000, scoped, tag = 'internal scratch']
  %s0 = inlined_call_operand.vmem [shape: f32[16,32], index: 0, kind: input, shape index: {}]
  %s1 = inlined_call_operand.vmem [shape: bf16[32,96], index: 1, kind: input, shape index: {}]
  %s2 = inlined_call_operand.vmem [shape: f32[1,96], index: 2, kind: input, shape index: {}]
  %s3 = inlined_call_operand.vmem [shape: bf16[16,96], index: 3, kind: output, shape index: {}]
  %s4 = sld [smem:[#allocation0]]
  $region45: #{encoder_forward.6} parent=0
    _
  %s6 = ssub.s32 1, %s4
  %s7 = scalar_select 0, %s6, %s4
  loop: start=0, step=1, limit=4
  $region2: #{encoder_forward.6} parent=0 // loop_pre_header
    _
  $region3: #{encoder_forward.6} parent=0 // loop_header
    %s9 = sphi 0, %s13
    %p10 = scmp.ge.s32.totalorder %s9, 4
    %s19 = sphi 0, %s21
    %s22 = sphi 0, %s19
    %s23 = sphi 0, %s22
    %s39 = sphi 0, %s23
    %s43 = sphi 0, %s43
    %s45 = sphi 0, %s43
    %s46 = sphi 0, %s45
    %s60 = sphi 0, %s46
    %s64 = sphi 0, %s64
    %s66 = sphi 0, %s64
    %s67 = sphi 0, %s66
    %s81 = sphi 0, %s67
    %s87 = sphi 0, %s89
    %s90 = sphi 0, %s87
    %s91 = sphi 0, %s90
    %s107 = sphi 0, %s91
  $region4: #{encoder_forward.6} parent=0 // loop_header_branch
    %12 = sbr.rel (%p10) target = $region8
  $region5: #{encoder_forward.6} parent=0 // loop_body
    %s14 = ssub.s32 %s9, 1
    %s15 = ssub.s32 %s9, 2
    %s16 = sadd.s32 %s9, 1
    %s17 = ssub.s32 %s9, %s16
    %p18 = scmp.eq.s32.totalorder %s17, 0
    %s20 = sadd.s32 %s19, 1
    %s21 = scalar_select %p18, %s19, %s20
    %p24 = pneg %p18
    %p25 = scmp.eq.s32.totalorder %s9, 1
    %p26 = por %p24, %p25
    %p27 = scmp.ne.s32.totalorder %s19, %s22
    %p28 = scmp.eq.s32.totalorder %s9, 0
    %p29 = por %p27, %p28
    %p30 = scmp.ne.s32.totalorder %s19, %s22
    %p31 = scmp.eq.s32.totalorder %s14, 1
    %p32 = por %p30, %p31
    %p33 = scmp.ne.s32.totalorder %s22, %s23
    %p34 = scmp.eq.s32.totalorder %s14, 0
    %p35 = por %p33, %p34
    %p36 = scmp.ne.s32.totalorder %s22, %s23
    %p37 = scmp.eq.s32.totalorder %s15, 1
    %p38 = por %p36, %p37
    %p40 = scmp.ne.s32.totalorder %s23, %s39
    %p41 = scmp.eq.s32.totalorder %s15, 0
    %p42 = por %p40, %p41
    %s44 = sadd.s32 %s43, 1
    %p47 = scmp.eq.s32.totalorder %s9, 1
    %p48 = scmp.ne.s32.totalorder %s43, %s45
    %p49 = scmp.eq.s32.totalorder %s9, 0
    %p50 = por %p48, %p49
    %p51 = scmp.ne.s32.totalorder %s43, %s45
    %p52 = scmp.eq.s32.totalorder %s14, 1
    %p53 = por %p51, %p52
    %p54 = scmp.ne.s32.totalorder %s45, %s46
    %p55 = scmp.eq.s32.totalorder %s14, 0
    %p56 = por %p54, %p55
    %p57 = scmp.ne.s32.totalorder %s45, %s46
    %p58 = scmp.eq.s32.totalorder %s15, 1
    %p59 = por %p57, %p58
    %p61 = scmp.ne.s32.totalorder %s46, %s60
    %p62 = scmp.eq.s32.totalorder %s15, 0
    %p63 = por %p61, %p62
    %s65 = sadd.s32 %s64, 1
    %p68 = scmp.eq.s32.totalorder %s9, 1
    %p69 = scmp.ne.s32.totalorder %s64, %s66
    %p70 = scmp.eq.s32.totalorder %s9, 0
    %p71 = por %p69, %p70
    %p72 = scmp.ne.s32.totalorder %s64, %s66
    %p73 = scmp.eq.s32.totalorder %s14, 1
    %p74 = por %p72, %p73
    %p75 = scmp.ne.s32.totalorder %s66, %s67
    %p76 = scmp.eq.s32.totalorder %s14, 0
    %p77 = por %p75, %p76
    %p78 = scmp.ne.s32.totalorder %s66, %s67
    %p79 = scmp.eq.s32.totalorder %s15, 1
    %p80 = por %p78, %p79
    %p82 = scmp.ne.s32.totalorder %s67, %s81
    %p83 = scmp.eq.s32.totalorder %s15, 0
    %p84 = por %p82, %p83
    %s85 = ssub.s32 %s9, %s16
    %p86 = scmp.eq.s32.totalorder %s85, 0
    %s88 = sadd.s32 %s87, 1
    %s89 = scalar_select %p86, %s87, %s88
    %p92 = pneg %p86
    %p93 = scmp.eq.s32.totalorder %s9, 1
    %p94 = por %p92, %p93
    %p95 = scmp.ne.s32.totalorder %s87, %s90
    %p96 = scmp.eq.s32.totalorder %s9, 0
    %p97 = por %p95, %p96
    %p98 = scmp.ne.s32.totalorder %s87, %s90
    %p99 = scmp.eq.s32.totalorder %s14, 1
    %p100 = por %p98, %p99
    %p101 = scmp.ne.s32.totalorder %s90, %s91
    %p102 = scmp.eq.s32.totalorder %s14, 0
    %p103 = por %p101, %p102
    %p104 = scmp.ne.s32.totalorder %s90, %s91
    %p105 = scmp.eq.s32.totalorder %s15, 1
    %p106 = por %p104, %p105
    %p108 = scmp.ne.s32.totalorder %s91, %s107
    %p109 = scmp.eq.s32.totalorder %s15, 0
    %p110 = por %p108, %p109
    %p111 = scmp.le.s32.totalorder 1, %s9
    %p112 = scmp.lt.s32.totalorder %s9, 3
    %p113 = pnand %p111, %p112
    %p114 = pneg %p113
    // Predicated region
    $region9: #{encoder_forward.6} parent=5 // pred_check
      _
    $region10: #{encoder_forward.6} parent=5 // pred_check_branch
      %116 = sbr.rel (%p113) target = $region12
    $region11: #{encoder_forward.6} parent=5 // pred_region
      %s117 = ssub.s32 %s9, 1
      // Predicated region
      $region13: #{encoder_forward.6} parent=11 // pred_check
        %p118 = pneg %p56
      $region14: #{encoder_forward.6} parent=11 // pred_check_branch
        %120 = sbr.rel (%p118) target = $region16
      $region15: #{encoder_forward.6} parent=11 // pred_region
        _
      $region16: #{encoder_forward.6} parent=11 // pred_fallthru
        _
      // Predicated region
      $region17: #{encoder_forward.6} parent=11 // pred_check
        %p121 = pneg %p77
      $region18: #{encoder_forward.6} parent=11 // pred_check_branch
        %123 = sbr.rel (%p121) target = $region20
      $region19: #{encoder_forward.6} parent=11 // pred_region
        _
      $region20: #{encoder_forward.6} parent=11 // pred_fallthru
        _
    $region12: #{encoder_forward.6} parent=5 // pred_fallthru
      _
    %p124 = scmp.lt.s32.totalorder %s9, 2
    // Predicated region
    $region21: #{encoder_forward.6} parent=5 // pred_check
      %p125 = pneg %p124
    $region22: #{encoder_forward.6} parent=5 // pred_check_branch
      %127 = sbr.rel (%p125) target = $region24
    $region23: #{encoder_forward.6} parent=5 // pred_region
      // Predicated region
      $region25: #{encoder_forward.6} parent=23 // pred_check
        %p128 = pneg %p29
      $region26: #{encoder_forward.6} parent=23 // pred_check_branch
        %130 = sbr.rel (%p128) target = $region28
      $region27: #{encoder_forward.6} parent=23 // pred_region
        %p131 = scmp.lt.s32.totalorder %s9, 1
        %s132 = scalar_select %p131, %s9, 1
        %s133 = smul.addr %s132, 8
        %s134 = scalar_lea.vmem %s0, %s133
      $region28: #{encoder_forward.6} parent=23 // pred_fallthru
        _
    $region24: #{encoder_forward.6} parent=5 // pred_fallthru
      _
    %p135 = scmp.le.s32.totalorder 1, %s9
    %p136 = scmp.lt.s32.totalorder %s9, 3
    %p137 = pnand %p135, %p136
    %p138 = pneg %p137
    // Predicated region
    $region29: #{encoder_forward.6} parent=5 // pred_check
      _
    $region30: #{encoder_forward.6} parent=5 // pred_check_branch
      %140 = sbr.rel (%p137) target = $region32
    $region31: #{encoder_forward.6} parent=5 // pred_region
      %s141 = ssub.s32 %s9, 1
      %p142 = scmp.lt.s32.totalorder %s14, 1
      %s143 = scalar_select %p142, %s14, 1
      %s144 = smul.addr %s143, 8
      %s145 = scalar_lea.vmem %s0, %s144
      %p146 = pneg %p35
      %p147 = pneg %p32
      %p148 = pneg %p56
      %p149 = pneg %p53
      %p150 = pneg %p77
      %p151 = pneg %p74
      %p152 = pneg %p103
      %p153 = pneg %p100
      %p154 = scmp.lt.s32.totalorder %s14, 1
      %s155 = scalar_select %p154, %s14, 1
      %s156 = smul.addr %s155, 4
      %s157 = scalar_lea.vmem %s3, %s156
      %p158 = scmp.lt.s32.totalorder %s14, 1
      %s159 = scalar_select %p158, %s14, 1
      %s160 = smul.addr %s159, 8
      %s161 = scalar_lea.vmem %s0, %s160
      %p162 = scmp.lt.s32.totalorder %s14, 1
      %s163 = scalar_select %p162, %s14, 1
      %s164 = smul.addr %s163, 4
      %s165 = scalar_lea.vmem %s3, %s164
      %v167 = vld [vmem:[%s161] sm:$0xff]
      %v168 = vpack.c.bf16 %v167, %v167
      %v169 = vld [vmem:[%s1] sm:$0xf]
      %v170 = vld [vmem:[%s1 + $0x4] sm:$0xf]
      %v171 = vld [vmem:[%s1 + $0x8] sm:$0xf]
      %v172 = vld [vmem:[%s1 + $0xc] sm:$0xf]
      %v173 = vld [vmem:[%s2] sm:$0x1]
      %v175 = vlaneseq
      %v176 = vshrl.u32 %v175, 7
      %v177 = vsub.s32 0, %v176
      %v178 = vrot.slane %v173, %v177
      %v184 = vunpack.c.l.b16 %v169
      %v185 = vunpack.c.l.b16 %v170
      %v186 = vunpack.c.l.b16 %v171
      %v187 = vunpack.c.l.b16 %v172
      %v188 = vpack.c.b16 %v185, %v184
      %v189 = vpack.c.b16 %v187, %v186
      %vm192 = vcmask 261120
      %v194 = vsel %vm192, %v168, 0
      %196 = vmatprep.subr.bf16.mxu0 0
      %197 = vmatpush1.bf16.msra.mxu0 %v188
      %198 = vmatprep.subr.bf16.mxu0 0
      %199 = vmatpush1.bf16.msra.mxu0 %v189
      %200 = vmatprep.subr.bf16.mxu0 0
      %201 = vmatpush1.bf16.msra.mxu0 0
      %202 = vmatprep.subr.bf16.mxu0 0
      %203 = vmatpush1.bf16.msra.mxu0 0
      %204 = vmatprep.subr.bf16.mxu0 0
      %205 = vmatpush1.bf16.msra.mxu0 0
      %206 = vmatprep.subr.bf16.mxu0 0
      %207 = vmatpush1.bf16.msra.mxu0 0
      %208 = vmatprep.subr.bf16.mxu0 0
      %209 = vmatpush1.bf16.msra.mxu0 0
      %210 = vmatprep.subr.bf16.mxu0 0
      %211 = vmatpush1.bf16.msra.mxu0 0
      %212 = vmatprep.subr.bf16.mxu0 0
      %213 = vmatpush1.bf16.msra.mxu0 0
      %214 = vmatprep.subr.bf16.mxu0 0
      %215 = vmatpush1.bf16.msra.mxu0 0
      %216 = vmatprep.subr.bf16.mxu0 0
      %217 = vmatpush1.bf16.msra.mxu0 0
      %218 = vmatprep.subr.bf16.mxu0 0
      %219 = vmatpush1.bf16.msra.mxu0 0
      %220 = vmatprep.subr.bf16.mxu0 0
      %221 = vmatpush1.bf16.msra.mxu0 0
      %222 = vmatprep.subr.bf16.mxu0 0
      %223 = vmatpush1.bf16.msra.mxu0 0
      %224 = vmatprep.subr.bf16.mxu0 0
      %225 = vmatpush1.bf16.msra.mxu0 0
      %226 = vmatprep.subr.bf16.mxu0 0
      %227 = vmatpush1.bf16.msra.mxu0 0
      %228 = vmatprep.mubr.bf16.mxu0 0
      %229 = vmatmul.mubr.bf16.gmra.mrb[0].mxu0 %v194
      %v230 = vpop.f32.mrb[0].mxu0
      %v231 = vadd.f32 %v178, %v230
      %v232 = vpop.f32.mrb[0].mxu0
      %v233 = vpop.f32.mrb[0].mxu0
      %v234 = vpop.f32.mrb[0].mxu0
      %235 = vdwg.mxu0
      %v236 = vpack.c.bf16 %v231, %v231
      %vm237 = vcmask 781312
      %238 = vst.msk [vmem:[%s165] sm:$0xf] %vm237, %v236
      %p239 = scmp.lt.s32.totalorder %s14, 1
      %s240 = scalar_select %p239, %s14, 1
      %s241 = smul.addr %s240, 4
      %s242 = scalar_lea.vmem %s3, %s241
      // Predicated region
      $region33: #{encoder_forward.6} parent=31 // pred_check
        %p243 = pneg %p100
      $region34: #{encoder_forward.6} parent=31 // pred_check_branch
        %245 = sbr.rel (%p243) target = $region36
      $region35: #{encoder_forward.6} parent=31 // pred_region
        _
      $region36: #{encoder_forward.6} parent=31 // pred_fallthru
        _
    $region32: #{encoder_forward.6} parent=5 // pred_fallthru
      _
    %p246 = scmp.le.s32.totalorder 2, %s9
    // Predicated region
    $region37: #{encoder_forward.6} parent=5 // pred_check
      %p247 = pneg %p246
    $region38: #{encoder_forward.6} parent=5 // pred_check_branch
      %249 = sbr.rel (%p247) target = $region40
    $region39: #{encoder_forward.6} parent=5 // pred_region
      %s250 = ssub.s32 %s9, 2
      // Predicated region
      $region41: #{encoder_forward.6} parent=39 // pred_check
        %p251 = pneg %p106
      $region42: #{encoder_forward.6} parent=39 // pred_check_branch
        %253 = sbr.rel (%p251) target = $region44
      $region43: #{encoder_forward.6} parent=39 // pred_region
        %p254 = scmp.lt.s32.totalorder %s15, 1
        %s255 = scalar_select %p254, %s15, 1
        %s256 = smul.addr %s255, 4
        %s257 = scalar_lea.vmem %s3, %s256
      $region44: #{encoder_forward.6} parent=39 // pred_fallthru
        _
    $region40: #{encoder_forward.6} parent=5 // pred_fallthru
      _
  $region6: #{encoder_forward.6} parent=0 // loop_footer
    %s13 = sadd.s32 1, %s9
  $region7: #{encoder_forward.6} parent=0 // loop_footer_branch
    %8 = sbr.rel target = $region3
  $region8: #{encoder_forward.6} parent=0 // loop_exit
    _

// kernel: encoder_forward.11
$region0: #{encoder_forward.11}
  #allocation0 [shape = 'u32[]', space=smem, size = 0x4, offset = 0x4, fixed_abs, tag = 'smem constant byte address 0x4 - core index']
  #allocation1 [shape = 'u32[144,128]{1,0:T(1,128)}', space=vmem, size = 0x12000, scoped, tag = 'internal scratch']
  %s0 = inlined_call_operand.vmem [shape: f32[16,32], index: 0, kind: input, shape index: {}]
  %s1 = inlined_call_operand.vmem [shape: bf16[32,64], index: 1, kind: input, shape index: {}]
  %s2 = inlined_call_operand.vmem [shape: f32[1,64], index: 2, kind: input, shape index: {}]
  %s3 = inlined_call_operand.vmem [shape: bf16[64,32], index: 3, kind: input, shape index: {}]
  %s4 = inlined_call_operand.vmem [shape: f32[1,32], index: 4, kind: input, shape index: {}]
  %s5 = inlined_call_operand.vmem [shape: f32[1,32], index: 5, kind: input, shape index: {}]
  %s6 = inlined_call_operand.vmem [shape: f32[1,32], index: 6, kind: input, shape index: {}]
  %s7 = inlined_call_operand.hbm [shape: f32[16,32], index: 7, kind: output, shape index: {}]
  %s8 = sld [smem:[#allocation0]]
  $region61: #{encoder_forward.11} parent=0
    _
  %s10 = ssub.s32 1, %s8
  %s11 = scalar_select 0, %s10, %s8
  $region1: #{encoder_forward.11} parent=0
    #allocation2 [shape = 'u8[8192]{0}', space=vmem, size = 0x2000, scoped, tag = 'output window, operand 0']
    #allocation3 [shape = 's32[2]{0}', space=sflag, size = 0x8, scoped, tag = 'scoped memory for encoder_forward.11']
    %12 = vsyncpa [#allocation3], 0
    %s13 = scalar_lea.sflag [#allocation3], 1
    %14 = vsyncpa %s13, 0
    loop: start=0, step=1, limit=4
    $region2: #{encoder_forward.11} parent=1 // loop_pre_header
      _
    $region3: #{encoder_forward.11} parent=1 // loop_header
      %s16 = sphi 0, %s20
      %p17 = scmp.ge.s32.totalorder %s16, 4
      %s26 = sphi 0, %s28
      %s29 = sphi 0, %s26
      %s30 = sphi 0, %s29
      %s46 = sphi 0, %s30
      %s50 = sphi 0, %s50
      %s52 = sphi 0, %s50
      %s53 = sphi 0, %s52
      %s67 = sphi 0, %s53
      %s71 = sphi 0, %s71
      %s73 = sphi 0, %s71
      %s74 = sphi 0, %s73
      %s88 = sphi 0, %s74
      %s92 = sphi 0, %s92
      %s94 = sphi 0, %s92
      %s95 = sphi 0, %s94
      %s109 = sphi 0, %s95
      %s113 = sphi 0, %s113
      %s115 = sphi 0, %s113
      %s116 = sphi 0, %s115
      %s130 = sphi 0, %s116
      %s134 = sphi 0, %s134
      %s136 = sphi 0, %s134
      %s137 = sphi 0, %s136
      %s151 = sphi 0, %s137
      %s155 = sphi 0, %s155
      %s157 = sphi 0, %s155
      %s158 = sphi 0, %s157
      %s172 = sphi 0, %s158
      %s178 = sphi 0, %s180
      %s181 = sphi 0, %s178
      %s182 = sphi 0, %s181
      %s198 = sphi 0, %s182
    $region4: #{encoder_forward.11} parent=1 // loop_header_branch
      %19 = sbr.rel (%p17) target = $region8
    $region5: #{encoder_forward.11} parent=1 // loop_body
      %s21 = ssub.s32 %s16, 1
      %s22 = ssub.s32 %s16, 2
      %s23 = sadd.s32 %s16, 1
      %s24 = ssub.s32 %s16, %s23
      %p25 = scmp.eq.s32.totalorder %s24, 0
      %s27 = sadd.s32 %s26, 1
      %s28 = scalar_select %p25, %s26, %s27
      %p31 = pneg %p25
      %p32 = scmp.eq.s32.totalorder %s16, 1
      %p33 = por %p31, %p32
      %p34 = scmp.ne.s32.totalorder %s26, %s29
      %p35 = scmp.eq.s32.totalorder %s16, 0
      %p36 = por %p34, %p35
      %p37 = scmp.ne.s32.totalorder %s26, %s29
      %p38 = scmp.eq.s32.totalorder %s21, 1
      %p39 = por %p37, %p38
      %p40 = scmp.ne.s32.totalorder %s29, %s30
      %p41 = scmp.eq.s32.totalorder %s21, 0
      %p42 = por %p40, %p41
      %p43 = scmp.ne.s32.totalorder %s29, %s30
      %p44 = scmp.eq.s32.totalorder %s22, 1
      %p45 = por %p43, %p44
      %p47 = scmp.ne.s32.totalorder %s30, %s46
      %p48 = scmp.eq.s32.totalorder %s22, 0
      %p49 = por %p47, %p48
      %s51 = sadd.s32 %s50, 1
      %p54 = scmp.eq.s32.totalorder %s16, 1
      %p55 = scmp.ne.s32.totalorder %s50, %s52
      %p56 = scmp.eq.s32.totalorder %s16, 0
      %p57 = por %p55, %p56
      %p58 = scmp.ne.s32.totalorder %s50, %s52
      %p59 = scmp.eq.s32.totalorder %s21, 1
      %p60 = por %p58, %p59
      %p61 = scmp.ne.s32.totalorder %s52, %s53
      %p62 = scmp.eq.s32.totalorder %s21, 0
      %p63 = por %p61, %p62
      %p64 = scmp.ne.s32.totalorder %s52, %s53
      %p65 = scmp.eq.s32.totalorder %s22, 1
      %p66 = por %p64, %p65
      %p68 = scmp.ne.s32.totalorder %s53, %s67
      %p69 = scmp.eq.s32.totalorder %s22, 0
      %p70 = por %p68, %p69
      %s72 = sadd.s32 %s71, 1
      %p75 = scmp.eq.s32.totalorder %s16, 1
      %p76 = scmp.ne.s32.totalorder %s71, %s73
      %p77 = scmp.eq.s32.totalorder %s16, 0
      %p78 = por %p76, %p77
      %p79 = scmp.ne.s32.totalorder %s71, %s73
      %p80 = scmp.eq.s32.totalorder %s21, 1
      %p81 = por %p79, %p80
      %p82 = scmp.ne.s32.totalorder %s73, %s74
      %p83 = scmp.eq.s32.totalorder %s21, 0
      %p84 = por %p82, %p83
      %p85 = scmp.ne.s32.totalorder %s73, %s74
      %p86 = scmp.eq.s32.totalorder %s22, 1
      %p87 = por %p85, %p86
      %p89 = scmp.ne.s32.totalorder %s74, %s88
      %p90 = scmp.eq.s32.totalorder %s22, 0
      %p91 = por %p89, %p90
      %s93 = sadd.s32 %s92, 1
      %p96 = scmp.eq.s32.totalorder %s16, 1
      %p97 = scmp.ne.s32.totalorder %s92, %s94
      %p98 = scmp.eq.s32.totalorder %s16, 0
      %p99 = por %p97, %p98
      %p100 = scmp.ne.s32.totalorder %s92, %s94
      %p101 = scmp.eq.s32.totalorder %s21, 1
      %p102 = por %p100, %p101
      %p103 = scmp.ne.s32.totalorder %s94, %s95
      %p104 = scmp.eq.s32.totalorder %s21, 0
      %p105 = por %p103, %p104
      %p106 = scmp.ne.s32.totalorder %s94, %s95
      %p107 = scmp.eq.s32.totalorder %s22, 1
      %p108 = por %p106, %p107
      %p110 = scmp.ne.s32.totalorder %s95, %s109
      %p111 = scmp.eq.s32.totalorder %s22, 0
      %p112 = por %p110, %p111
      %s114 = sadd.s32 %s113, 1
      %p117 = scmp.eq.s32.totalorder %s16, 1
      %p118 = scmp.ne.s32.totalorder %s113, %s115
      %p119 = scmp.eq.s32.totalorder %s16, 0
      %p120 = por %p118, %p119
      %p121 = scmp.ne.s32.totalorder %s113, %s115
      %p122 = scmp.eq.s32.totalorder %s21, 1
      %p123 = por %p121, %p122
      %p124 = scmp.ne.s32.totalorder %s115, %s116
      %p125 = scmp.eq.s32.totalorder %s21, 0
      %p126 = por %p124, %p125
      %p127 = scmp.ne.s32.totalorder %s115, %s116
      %p128 = scmp.eq.s32.totalorder %s22, 1
      %p129 = por %p127, %p128
      %p131 = scmp.ne.s32.totalorder %s116, %s130
      %p132 = scmp.eq.s32.totalorder %s22, 0
      %p133 = por %p131, %p132
      %s135 = sadd.s32 %s134, 1
      %p138 = scmp.eq.s32.totalorder %s16, 1
      %p139 = scmp.ne.s32.totalorder %s134, %s136
      %p140 = scmp.eq.s32.totalorder %s16, 0
      %p141 = por %p139, %p140
      %p142 = scmp.ne.s32.totalorder %s134, %s136
      %p143 = scmp.eq.s32.totalorder %s21, 1
      %p144 = por %p142, %p143
      %p145 = scmp.ne.s32.totalorder %s136, %s137
      %p146 = scmp.eq.s32.totalorder %s21, 0
      %p147 = por %p145, %p146
      %p148 = scmp.ne.s32.totalorder %s136, %s137
      %p149 = scmp.eq.s32.totalorder %s22, 1
      %p150 = por %p148, %p149
      %p152 = scmp.ne.s32.totalorder %s137, %s151
      %p153 = scmp.eq.s32.totalorder %s22, 0
      %p154 = por %p152, %p153
      %s156 = sadd.s32 %s155, 1
      %p159 = scmp.eq.s32.totalorder %s16, 1
      %p160 = scmp.ne.s32.totalorder %s155, %s157
      %p161 = scmp.eq.s32.totalorder %s16, 0
      %p162 = por %p160, %p161
      %p163 = scmp.ne.s32.totalorder %s155, %s157
      %p164 = scmp.eq.s32.totalorder %s21, 1
      %p165 = por %p163, %p164
      %p166 = scmp.ne.s32.totalorder %s157, %s158
      %p167 = scmp.eq.s32.totalorder %s21, 0
      %p168 = por %p166, %p167
      %p169 = scmp.ne.s32.totalorder %s157, %s158
      %p170 = scmp.eq.s32.totalorder %s22, 1
      %p171 = por %p169, %p170
      %p173 = scmp.ne.s32.totalorder %s158, %s172
      %p174 = scmp.eq.s32.totalorder %s22, 0
      %p175 = por %p173, %p174
      %s176 = ssub.s32 %s16, %s23
      %p177 = scmp.eq.s32.totalorder %s176, 0
      %s179 = sadd.s32 %s178, 1
      %s180 = scalar_select %p177, %s178, %s179
      %p183 = pneg %p177
      %p184 = scmp.eq.s32.totalorder %s16, 1
      %p185 = por %p183, %p184
      %p186 = scmp.ne.s32.totalorder %s178, %s181
      %p187 = scmp.eq.s32.totalorder %s16, 0
      %p188 = por %p186, %p187
      %p189 = scmp.ne.s32.totalorder %s178, %s181
      %p190 = scmp.eq.s32.totalorder %s21, 1
      %p191 = por %p189, %p190
      %p192 = scmp.ne.s32.totalorder %s181, %s182
      %p193 = scmp.eq.s32.totalorder %s21, 0
      %p194 = por %p192, %p193
      %p195 = scmp.ne.s32.totalorder %s181, %s182
      %p196 = scmp.eq.s32.totalorder %s22, 1
      %p197 = por %p195, %p196
      %p199 = scmp.ne.s32.totalorder %s182, %s198
      %p200 = scmp.eq.s32.totalorder %s22, 0
      %p201 = por %p199, %p200
      %p202 = scmp.le.s32.totalorder 1, %s16
      %p203 = scmp.lt.s32.totalorder %s16, 3
      %p204 = pnand %p202, %p203
      %p205 = pneg %p204
      // Predicated region
      $region9: #{encoder_forward.11} parent=5 // pred_check
        _
      $region10: #{encoder_forward.11} parent=5 // pred_check_branch
        %207 = sbr.rel (%p204) target = $region12
      $region11: #{encoder_forward.11} parent=5 // pred_region
        %s208 = ssub.s32 %s16, 1
        // Predicated region
        $region13: #{encoder_forward.11} parent=11 // pred_check
          %p209 = pneg %p63
        $region14: #{encoder_forward.11} parent=11 // pred_check_branch
          %211 = sbr.rel (%p209) target = $region16
        $region15: #{encoder_forward.11} parent=11 // pred_region
          _
        $region16: #{encoder_forward.11} parent=11 // pred_fallthru
          _
        // Predicated region
        $region17: #{encoder_forward.11} parent=11 // pred_check
          %p212 = pneg %p84
        $region18: #{encoder_forward.11} parent=11 // pred_check_branch
          %214 = sbr.rel (%p212) target = $region20
        $region19: #{encoder_forward.11} parent=11 // pred_region
          _
        $region20: #{encoder_forward.11} parent=11 // pred_fallthru
          _
        // Predicated region
        $region21: #{encoder_forward.11} parent=11 // pred_check
          %p215 = pneg %p105
        $region22: #{encoder_forward.11} parent=11 // pred_check_branch
          %217 = sbr.rel (%p215) target = $region24
        $region23: #{encoder_forward.11} parent=11 // pred_region
          _
        $region24: #{encoder_forward.11} parent=11 // pred_fallthru
          _
        // Predicated region
        $region25: #{encoder_forward.11} parent=11 // pred_check
          %p218 = pneg %p126
        $region26: #{encoder_forward.11} parent=11 // pred_check_branch
          %220 = sbr.rel (%p218) target = $region28
        $region27: #{encoder_forward.11} parent=11 // pred_region
          _
        $region28: #{encoder_forward.11} parent=11 // pred_fallthru
          _
        // Predicated region
        $region29: #{encoder_forward.11} parent=11 // pred_check
          %p221 = pneg %p147
        $region30: #{encoder_forward.11} parent=11 // pred_check_branch
          %223 = sbr.rel (%p221) target = $region32
        $region31: #{encoder_forward.11} parent=11 // pred_region
          _
        $region32: #{encoder_forward.11} parent=11 // pred_fallthru
          _
        // Predicated region
        $region33: #{encoder_forward.11} parent=11 // pred_check
          %p224 = pneg %p168
        $region34: #{encoder_forward.11} parent=11 // pred_check_branch
          %226 = sbr.rel (%p224) target = $region36
        $region35: #{encoder_forward.11} parent=11 // pred_region
          _
        $region36: #{encoder_forward.11} parent=11 // pred_fallthru
          _
      $region12: #{encoder_forward.11} parent=5 // pred_fallthru
        _
      %p227 = scmp.lt.s32.totalorder %s16, 2
      // Predicated region
      $region37: #{encoder_forward.11} parent=5 // pred_check
        %p228 = pneg %p227
      $region38: #{encoder_forward.11} parent=5 // pred_check_branch
        %230 = sbr.rel (%p228) target = $region40
      $region39: #{encoder_forward.11} parent=5 // pred_region
        // Predicated region
        $region41: #{encoder_forward.11} parent=39 // pred_check
          %p231 = pneg %p36
        $region42: #{encoder_forward.11} parent=39 // pred_check_branch
          %233 = sbr.rel (%p231) target = $region44
        $region43: #{encoder_forward.11} parent=39 // pred_region
          %p234 = scmp.lt.s32.totalorder %s16, 1
          %s235 = scalar_select %p234, %s16, 1
          %s236 = smul.addr %s235, 8
          %s237 = scalar_lea.vmem %s0, %s236
        $region44: #{encoder_forward.11} parent=39 // pred_fallthru
          _
      $region40: #{encoder_forward.11} parent=5 // pred_fallthru
        _
      %p238 = scmp.le.s32.totalorder 1, %s16
      %p239 = scmp.lt.s32.totalorder %s16, 3
      %p240 = pnand %p238, %p239
      %p241 = pneg %p240
      // Predicated region
      $region45: #{encoder_forward.11} parent=5 // pred_check
        _
      $region46: #{encoder_forward.11} parent=5 // pred_check_branch
        %243 = sbr.rel (%p240) target = $region48
      $region47: #{encoder_forward.11} parent=5 // pred_region
        %s244 = ssub.s32 %s16, 1
        %p245 = scmp.lt.s32.totalorder %s21, 1
        %s246 = scalar_select %p245, %s21, 1
        %s247 = smul.addr %s246, 8
        %s248 = scalar_lea.vmem %s0, %s247
        %p249 = pneg %p42
        %p250 = pneg %p39
        %p251 = pneg %p63
        %p252 = pneg %p60
        %p253 = pneg %p84
        %p254 = pneg %p81
        %p255 = pneg %p105
        %p256 = pneg %p102
        %p257 = pneg %p126
        %p258 = pneg %p123
        %p259 = pneg %p147
        %p260 = pneg %p144
        %p261 = pneg %p168
        %p262 = pneg %p165
        %p263 = pneg %p194
        %p264 = pneg %p191
        %s265 = sand.u32 %s181, 1
        %s266 = scalar_lea.sflag [#allocation3], %s265
        %s267 = sand.u32 %s181, 1
        %s268 = smul.addr %s267, 8
        %s269 = scalar_lea.vmem [#allocation2], %s268
        %p270 = scmp.lt.s32.totalorder %s21, 1
        %s271 = scalar_select %p270, %s21, 1
        %s272 = smul.addr %s271, 8
        %s273 = scalar_lea.vmem %s0, %s272
        %v275 = vld [vmem:[%s273] sm:$0xff]
        %v276 = vpack.c.bf16 %v275, %v275
        %v277 = vld [vmem:[%s1] sm:$0xf]
        %v278 = vld [vmem:[%s1 + $0x4] sm:$0xf]
        %v279 = vld [vmem:[%s1 + $0x8] sm:$0xf]
        %v280 = vld [vmem:[%s1 + $0xc] sm:$0xf]
        %v281 = vld [vmem:[%s2] sm:$0x1]
        %v283 = vlaneseq
        %v284 = vshrl.u32 %v283, 7
        %v285 = vsub.s32 0, %v284
        %v286 = vrot.slane %v281, %v285
        %v292 = vunpack.c.l.b16 %v277
        %v293 = vunpack.c.l.b16 %v278
        %v294 = vunpack.c.l.b16 %v279
        %v295 = vunpack.c.l.b16 %v280
        %v296 = vpack.c.b16 %v293, %v292
        %v297 = vpack.c.b16 %v295, %v294
        %vm300 = vcmask 261120
        %v302 = vsel %vm300, %v276, 0
        %304 = vmatprep.subr.bf16.mxu0 0
        %305 = vmatpush1.bf16.msra.mxu0 %v296
        %306 = vmatprep.subr.bf16.mxu0 0
        %307 = vmatpush1.bf16.msra.mxu0 %v297
        %308 = vmatprep.subr.bf16.mxu0 0
        %309 = vmatpush1.bf16.msra.mxu0 0
        %310 = vmatprep.subr.bf16.mxu0 0
        %311 = vmatpush1.bf16.msra.mxu0 0
        %312 = vmatprep.subr.bf16.mxu0 0
        %313 = vmatpush1.bf16.msra.mxu0 0
        %314 = vmatprep.subr.bf16.mxu0 0
        %315 = vmatpush1.bf16.msra.mxu0 0
        %316 = vmatprep.subr.bf16.mxu0 0
        %317 = vmatpush1.bf16.msra.mxu0 0
        %318 = vmatprep.subr.bf16.mxu0 0
        %319 = vmatpush1.bf16.msra.mxu0 0
        %320 = vmatprep.subr.bf16.mxu0 0
        %321 = vmatpush1.bf16.msra.mxu0 0
        %322 = vmatprep.subr.bf16.mxu0 0
        %323 = vmatpush1.bf16.msra.mxu0 0
        %324 = vmatprep.subr.bf16.mxu0 0
        %325 = vmatpush1.bf16.msra.mxu0 0
        %326 = vmatprep.subr.bf16.mxu0 0
        %327 = vmatpush1.bf16.msra.mxu0 0
        %328 = vmatprep.subr.bf16.mxu0 0
        %329 = vmatpush1.bf16.msra.mxu0 0
        %330 = vmatprep.subr.bf16.mxu0 0
        %331 = vmatpush1.bf16.msra.mxu0 0
        %332 = vmatprep.subr.bf16.mxu0 0
        %333 = vmatpush1.bf16.msra.mxu0 0
        %334 = vmatprep.subr.bf16.mxu0 0
        %335 = vmatpush1.bf16.msra.mxu0 0
        %336 = vmatprep.mubr.bf16.mxu0 0
        %337 = vmatmul.mubr.bf16.gmra.mrb[0].mxu0 %v302
        %v338 = vpop.f32.mrb[0].mxu0
        %v339 = vadd.f32 %v286, %v338
        %v340 = vpop.f32.mrb[0].mxu0
        %v341 = vpop.f32.mrb[0].mxu0
        %v342 = vpop.f32.mrb[0].mxu0
        %343 = vdwg.mxu0
        %v344 = vmax.f32 %v339, 0.0
        %v345 = vpack.c.bf16 %v344, %v344
        %v346 = vld [vmem:[%s3] sm:$0xf]
        %v347 = vld [vmem:[%s3 + $0x4] sm:$0xf]
        %v348 = vld [vmem:[%s3 + $0x8] sm:$0xf]
        %v349 = vld [vmem:[%s3 + $0xc] sm:$0xf]
        %v350 = vld [vmem:[%s3 + $0x10] sm:$0xf]
        %v351 = vld [vmem:[%s3 + $0x14] sm:$0xf]
        %v352 = vld [vmem:[%s3 + $0x18] sm:$0xf]
        %v353 = vld [vmem:[%s3 + $0x1c] sm:$0xf]
        %v354 = vld [vmem:[%s4] sm:$0x1]
        %v356 = vlaneseq
        %v357 = vshrl.u32 %v356, 7
        %v358 = vsub.s32 0, %v357
        %v359 = vrot.slane %v354, %v358
        %v369 = vunpack.c.l.b16 %v346
        %v370 = vunpack.c.l.b16 %v347
        %v371 = vunpack.c.l.b16 %v348
        %v372 = vunpack.c.l.b16 %v349
        %v373 = vunpack.c.l.b16 %v350
        %v374 = vunpack.c.l.b16 %v351
        %v375 = vunpack.c.l.b16 %v352
        %v376 = vunpack.c.l.b16 %v353
        %v377 = vpack.c.b16 %v370, %v369
        %v378 = vpack.c.b16 %v372, %v371
        %v379 = vpack.c.b16 %v374, %v373
        %v380 = vpack.c.b16 %v376, %v375
        %vm385 = vcmask 523264
        %v387 = vsel %vm385, %v345, 0
        %389 = vmatprep.subr.bf16.mxu0 0
        %390 = vmatpush1.bf16.msra.mxu0 %v377
        %391 = vmatprep.subr.bf16.mxu0 0
        %392 = vmatpush1.bf16.msra.mxu0 %v378
        %393 = vmatprep.subr.bf16.mxu0 0
        %394 = vmatpush1.bf16.msra.mxu0 %v379
        %395 = vmatprep.subr.bf16.mxu0 0
        %396 = vmatpush1.bf16.msra.mxu0 %v380
        %397 = vmatprep.subr.bf16.mxu0 0
        %398 = vmatpush1.bf16.msra.mxu0 0
        %399 = vmatprep.subr.bf16.mxu0 0
        %400 = vmatpush1.bf16.msra.mxu0 0
        %401 = vmatprep.subr.bf16.mxu0 0
        %402 = vmatpush1.bf16.msra.mxu0 0
        %403 = vmatprep.subr.bf16.mxu0 0
        %404 = vmatpush1.bf16.msra.mxu0 0
        %405 = vmatprep.subr.bf16.mxu0 0
        %406 = vmatpush1.bf16.msra.mxu0 0
        %407 = vmatprep.subr.bf16.mxu0 0
        %408 = vmatpush1.bf16.msra.mxu0 0
        %409 = vmatprep.subr.bf16.mxu0 0
        %410 = vmatpush1.bf16.msra.mxu0 0
        %411 = vmatprep.subr.bf16.mxu0 0
        %412 = vmatpush1.bf16.msra.mxu0 0
        %413 = vmatprep.subr.bf16.mxu0 0
        %414 = vmatpush1.bf16.msra.mxu0 0
        %415 = vmatprep.subr.bf16.mxu0 0
        %416 = vmatpush1.bf16.msra.mxu0 0
        %417 = vmatprep.subr.bf16.mxu0 0
        %418 = vmatpush1.bf16.msra.mxu0 0
        %419 = vmatprep.subr.bf16.mxu0 0
        %420 = vmatpush1.bf16.msra.mxu0 0
        %421 = vmatprep.mubr.bf16.mxu0 0
        %422 = vmatmul.mubr.bf16.gmra.mrb[0].mxu0 %v387
        %v423 = vpop.f32.mrb[0].mxu0
        %v424 = vadd.f32 %v359, %v423
        %v425 = vpop.f32.mrb[0].mxu0
        %v426 = vpop.f32.mrb[0].mxu0
        %v427 = vpop.f32.mrb[0].mxu0
        %428 = vdwg.mxu0
        %v429 = vadd.f32 %v424, %v275
        %v430 = vsel %vm300, %v429, 0.0
        %431 = vadd.xlane.f32.xlu0 %v430
        %v432 = vpop.xlane.xlu0 %431
        %v433 = vrcp.pop 32.0
        %v434 = vmul.f32 %v432, %v433
        %v435 = vsub.f32 %v429, %v434
        %v436 = vmul.f32 %v435, %v435
        %v437 = vsel %vm300, %v436, 0.0
        %438 = vadd.xlane.f32.xlu0 %v437
        %v439 = vpop.xlane.xlu0 %438
        %v440 = vmul.f32 %v439, %v433
        %v441 = vadd.f32 %v440, 1e-12
        %v442 = vrsqrt.pop %v441
        %v443 = vmul.f32 %v435, %v442
        %v444 = vld [vmem:[%s5] sm:$0x1]
        %v446 = vlaneseq
        %v447 = vshrl.u32 %v446, 7
        %v448 = vsub.s32 0, %v447
        %v449 = vrot.slane %v444, %v448
        %v451 = vmul.f32 %v443, %v449
        %v452 = vld [vmem:[%s6] sm:$0x1]
        %v454 = vlaneseq
        %v455 = vshrl.u32 %v454, 7
        %v456 = vsub.s32 0, %v455
        %v457 = vrot.slane %v452, %v456
        %v459 = vadd.f32 %v451, %v457
        %460 = vst.msk [vmem:[%s269] sm:$0xff] %vm300, %v459
        %s461 = sand.u32 %s181, 1
        %s462 = scalar_lea.sflag [#allocation3], %s461
        %s463 = sand.u32 %s181, 1
        %s464 = smul.addr %s463, 8
        %s465 = scalar_lea.vmem [#allocation2], %s464
        // Predicated region
        $region49: #{encoder_forward.11} parent=47 // pred_check
          %p466 = pneg %p191
        $region50: #{encoder_forward.11} parent=47 // pred_check_branch
          %468 = sbr.rel (%p466) target = $region52
        $region51: #{encoder_forward.11} parent=47 // pred_region
          %s470 = ssub.s32 128, 128
          %471 = vsyncadd %s462, %s470
          %s472 = smul.addr %s21, 128
          %s473 = scalar_lea.hbm %s7, %s472
          %s475 = sshll.u32 %s465, 4
          %s476 = int_to_ptr.vmem [resolvable:$true] %s475
          %478 = dma.vmem_to_hbm [thread:$0]  %s476, 128, %s473, %s462
        $region52: #{encoder_forward.11} parent=47 // pred_fallthru
          _
      $region48: #{encoder_forward.11} parent=5 // pred_fallthru
        _
      %p479 = scmp.le.s32.totalorder 2, %s16
      // Predicated region
      $region53: #{encoder_forward.11} parent=5 // pred_check
        %p480 = pneg %p479
      $region54: #{encoder_forward.11} parent=5 // pred_check_branch
        %482 = sbr.rel (%p480) target = $region56
      $region55: #{encoder_forward.11} parent=5 // pred_region
        %s483 = ssub.s32 %s16, 2
        // Predicated region
        $region57: #{encoder_forward.11} parent=55 // pred_check
          %p484 = pneg %p197
        $region58: #{encoder_forward.11} parent=55 // pred_check_branch
          %486 = sbr.rel (%p484) target = $region60
        $region59: #{encoder_forward.11} parent=55 // pred_region
          %s487 = sand.u32 %s182, 1
          %s488 = scalar_lea.sflag [#allocation3], %s487
          %s489 = sand.u32 %s182, 1
          %s490 = smul.addr %s489, 8
          %s491 = scalar_lea.vmem [#allocation2], %s490
          %492 = dma.done %s488, 128
        $region60: #{encoder_forward.11} parent=55 // pred_fallthru
          _
      $region56: #{encoder_forward.11} parent=5 // pred_fallthru
        _
    $region6: #{encoder_forward.11} parent=1 // loop_footer
      %s20 = sadd.s32 1, %s16
    $region7: #{encoder_forward.11} parent=1 // loop_footer_branch
      %15 = sbr.rel target = $region3
    $region8: #{encoder_forward.11} parent=1 // loop_exit
      _
    %493 = vsyncpa [#allocation3], 1
    %s494 = scalar_lea.sflag [#allocation3], 1
    %495 = vsyncpa %s494, 1

// kernel: encoder_forward.8
$region0: #{encoder_forward.8}
  #allocation0 [shape = 'u32[]', space=smem, size = 0x4, offset = 0x4, fixed_abs, tag = 'smem constant byte address 0x4 - core index']
  #allocation1 [shape = 'u32[144,128]{1,0:T(1,128)}', space=vmem, size = 0x12000, scoped, tag = 'internal scratch']
  %s0 = inlined_call_operand.vmem [shape: f32[16,32], index: 0, kind: input, shape index: {}]
  %s1 = inlined_call_operand.vmem [shape: bf16[32,64], index: 1, kind: input, shape index: {}]
  %s2 = inlined_call_operand.vmem [shape: f32[1,64], index: 2, kind: input, shape index: {}]
  %s3 = inlined_call_operand.vmem [shape: bf16[64,32], index: 3, kind: input, shape index: {}]
  %s4 = inlined_call_operand.vmem [shape: f32[1,32], index: 4, kind: input, shape index: {}]
  %s5 = inlined_call_operand.vmem [shape: f32[1,32], index: 5, kind: input, shape index: {}]
  %s6 = inlined_call_operand.vmem [shape: f32[1,32], index: 6, kind: input, shape index: {}]
  %s7 = inlined_call_operand.vmem [shape: f32[16,32], index: 7, kind: output, shape index: {}]
  %s8 = sld [smem:[#allocation0]]
  $region61: #{encoder_forward.8} parent=0
    _
  %s10 = ssub.s32 1, %s8
  %s11 = scalar_select 0, %s10, %s8
  loop: start=0, step=1, limit=4
  $region2: #{encoder_forward.8} parent=0 // loop_pre_header
    _
  $region3: #{encoder_forward.8} parent=0 // loop_header
    %s13 = sphi 0, %s17
    %p14 = scmp.ge.s32.totalorder %s13, 4
    %s23 = sphi 0, %s25
    %s26 = sphi 0, %s23
    %s27 = sphi 0, %s26
    %s43 = sphi 0, %s27
    %s47 = sphi 0, %s47
    %s49 = sphi 0, %s47
    %s50 = sphi 0, %s49
    %s64 = sphi 0, %s50
    %s68 = sphi 0, %s68
    %s70 = sphi 0, %s68
    %s71 = sphi 0, %s70
    %s85 = sphi 0, %s71
    %s89 = sphi 0, %s89
    %s91 = sphi 0, %s89
    %s92 = sphi 0, %s91
    %s106 = sphi 0, %s92
    %s110 = sphi 0, %s110
    %s112 = sphi 0, %s110
    %s113 = sphi 0, %s112
    %s127 = sphi 0, %s113
    %s131 = sphi 0, %s131
    %s133 = sphi 0, %s131
    %s134 = sphi 0, %s133
    %s148 = sphi 0, %s134
    %s152 = sphi 0, %s152
    %s154 = sphi 0, %s152
    %s155 = sphi 0, %s154
    %s169 = sphi 0, %s155
    %s175 = sphi 0, %s177
    %s178 = sphi 0, %s175
    %s179 = sphi 0, %s178
    %s195 = sphi 0, %s179
  $region4: #{encoder_forward.8} parent=0 // loop_header_branch
    %16 = sbr.rel (%p14) target = $region8
  $region5: #{encoder_forward.8} parent=0 // loop_body
    %s18 = ssub.s32 %s13, 1
    %s19 = ssub.s32 %s13, 2
    %s20 = sadd.s32 %s13, 1
    %s21 = ssub.s32 %s13, %s20
    %p22 = scmp.eq.s32.totalorder %s21, 0
    %s24 = sadd.s32 %s23, 1
    %s25 = scalar_select %p22, %s23, %s24
    %p28 = pneg %p22
    %p29 = scmp.eq.s32.totalorder %s13, 1
    %p30 = por %p28, %p29
    %p31 = scmp.ne.s32.totalorder %s23, %s26
    %p32 = scmp.eq.s32.totalorder %s13, 0
    %p33 = por %p31, %p32
    %p34 = scmp.ne.s32.totalorder %s23, %s26
    %p35 = scmp.eq.s32.totalorder %s18, 1
    %p36 = por %p34, %p35
    %p37 = scmp.ne.s32.totalorder %s26, %s27
    %p38 = scmp.eq.s32.totalorder %s18, 0
    %p39 = por %p37, %p38
    %p40 = scmp.ne.s32.totalorder %s26, %s27
    %p41 = scmp.eq.s32.totalorder %s19, 1
    %p42 = por %p40, %p41
    %p44 = scmp.ne.s32.totalorder %s27, %s43
    %p45 = scmp.eq.s32.totalorder %s19, 0
    %p46 = por %p44, %p45
    %s48 = sadd.s32 %s47, 1
    %p51 = scmp.eq.s32.totalorder %s13, 1
    %p52 = scmp.ne.s32.totalorder %s47, %s49
    %p53 = scmp.eq.s32.totalorder %s13, 0
    %p54 = por %p52, %p53
    %p55 = scmp.ne.s32.totalorder %s47, %s49
    %p56 = scmp.eq.s32.totalorder %s18, 1
    %p57 = por %p55, %p56
    %p58 = scmp.ne.s32.totalorder %s49, %s50
    %p59 = scmp.eq.s32.totalorder %s18, 0
    %p60 = por %p58, %p59
    %p61 = scmp.ne.s32.totalorder %s49, %s50
    %p62 = scmp.eq.s32.totalorder %s19, 1
    %p63 = por %p61, %p62
    %p65 = scmp.ne.s32.totalorder %s50, %s64
    %p66 = scmp.eq.s32.totalorder %s19, 0
    %p67 = por %p65, %p66
    %s69 = sadd.s32 %s68, 1
    %p72 = scmp.eq.s32.totalorder %s13, 1
    %p73 = scmp.ne.s32.totalorder %s68, %s70
    %p74 = scmp.eq.s32.totalorder %s13, 0
    %p75 = por %p73, %p74
    %p76 = scmp.ne.s32.totalorder %s68, %s70
    %p77 = scmp.eq.s32.totalorder %s18, 1
    %p78 = por %p76, %p77
    %p79 = scmp.ne.s32.totalorder %s70, %s71
    %p80 = scmp.eq.s32.totalorder %s18, 0
    %p81 = por %p79, %p80
    %p82 = scmp.ne.s32.totalorder %s70, %s71
    %p83 = scmp.eq.s32.totalorder %s19, 1
    %p84 = por %p82, %p83
    %p86 = scmp.ne.s32.totalorder %s71, %s85
    %p87 = scmp.eq.s32.totalorder %s19, 0
    %p88 = por %p86, %p87
    %s90 = sadd.s32 %s89, 1
    %p93 = scmp.eq.s32.totalorder %s13, 1
    %p94 = scmp.ne.s32.totalorder %s89, %s91
    %p95 = scmp.eq.s32.totalorder %s13, 0
    %p96 = por %p94, %p95
    %p97 = scmp.ne.s32.totalorder %s89, %s91
    %p98 = scmp.eq.s32.totalorder %s18, 1
    %p99 = por %p97, %p98
    %p100 = scmp.ne.s32.totalorder %s91, %s92
    %p101 = scmp.eq.s32.totalorder %s18, 0
    %p102 = por %p100, %p101
    %p103 = scmp.ne.s32.totalorder %s91, %s92
    %p104 = scmp.eq.s32.totalorder %s19, 1
    %p105 = por %p103, %p104
    %p107 = scmp.ne.s32.totalorder %s92, %s106
    %p108 = scmp.eq.s32.totalorder %s19, 0
    %p109 = por %p107, %p108
    %s111 = sadd.s32 %s110, 1
    %p114 = scmp.eq.s32.totalorder %s13, 1
    %p115 = scmp.ne.s32.totalorder %s110, %s112
    %p116 = scmp.eq.s32.totalorder %s13, 0
    %p117 = por %p115, %p116
    %p118 = scmp.ne.s32.totalorder %s110, %s112
    %p119 = scmp.eq.s32.totalorder %s18, 1
    %p120 = por %p118, %p119
    %p121 = scmp.ne.s32.totalorder %s112, %s113
    %p122 = scmp.eq.s32.totalorder %s18, 0
    %p123 = por %p121, %p122
    %p124 = scmp.ne.s32.totalorder %s112, %s113
    %p125 = scmp.eq.s32.totalorder %s19, 1
    %p126 = por %p124, %p125
    %p128 = scmp.ne.s32.totalorder %s113, %s127
    %p129 = scmp.eq.s32.totalorder %s19, 0
    %p130 = por %p128, %p129
    %s132 = sadd.s32 %s131, 1
    %p135 = scmp.eq.s32.totalorder %s13, 1
    %p136 = scmp.ne.s32.totalorder %s131, %s133
    %p137 = scmp.eq.s32.totalorder %s13, 0
    %p138 = por %p136, %p137
    %p139 = scmp.ne.s32.totalorder %s131, %s133
    %p140 = scmp.eq.s32.totalorder %s18, 1
    %p141 = por %p139, %p140
    %p142 = scmp.ne.s32.totalorder %s133, %s134
    %p143 = scmp.eq.s32.totalorder %s18, 0
    %p144 = por %p142, %p143
    %p145 = scmp.ne.s32.totalorder %s133, %s134
    %p146 = scmp.eq.s32.totalorder %s19, 1
    %p147 = por %p145, %p146
    %p149 = scmp.ne.s32.totalorder %s134, %s148
    %p150 = scmp.eq.s32.totalorder %s19, 0
    %p151 = por %p149, %p150
    %s153 = sadd.s32 %s152, 1
    %p156 = scmp.eq.s32.totalorder %s13, 1
    %p157 = scmp.ne.s32.totalorder %s152, %s154
    %p158 = scmp.eq.s32.totalorder %s13, 0
    %p159 = por %p157, %p158
    %p160 = scmp.ne.s32.totalorder %s152, %s154
    %p161 = scmp.eq.s32.totalorder %s18, 1
    %p162 = por %p160, %p161
    %p163 = scmp.ne.s32.totalorder %s154, %s155
    %p164 = scmp.eq.s32.totalorder %s18, 0
    %p165 = por %p163, %p164
    %p166 = scmp.ne.s32.totalorder %s154, %s155
    %p167 = scmp.eq.s32.totalorder %s19, 1
    %p168 = por %p166, %p167
    %p170 = scmp.ne.s32.totalorder %s155, %s169
    %p171 = scmp.eq.s32.totalorder %s19, 0
    %p172 = por %p170, %p171
    %s173 = ssub.s32 %s13, %s20
    %p174 = scmp.eq.s32.totalorder %s173, 0
    %s176 = sadd.s32 %s175, 1
    %s177 = scalar_select %p174, %s175, %s176
    %p180 = pneg %p174
    %p181 = scmp.eq.s32.totalorder %s13, 1
    %p182 = por %p180, %p181
    %p183 = scmp.ne.s32.totalorder %s175, %s178
    %p184 = scmp.eq.s32.totalorder %s13, 0
    %p185 = por %p183, %p184
    %p186 = scmp.ne.s32.totalorder %s175, %s178
    %p187 = scmp.eq.s32.totalorder %s18, 1
    %p188 = por %p186, %p187
    %p189 = scmp.ne.s32.totalorder %s178, %s179
    %p190 = scmp.eq.s32.totalorder %s18, 0
    %p191 = por %p189, %p190
    %p192 = scmp.ne.s32.totalorder %s178, %s179
    %p193 = scmp.eq.s32.totalorder %s19, 1
    %p194 = por %p192, %p193
    %p196 = scmp.ne.s32.totalorder %s179, %s195
    %p197 = scmp.eq.s32.totalorder %s19, 0
    %p198 = por %p196, %p197
    %p199 = scmp.le.s32.totalorder 1, %s13
    %p200 = scmp.lt.s32.totalorder %s13, 3
    %p201 = pnand %p199, %p200
    %p202 = pneg %p201
    // Predicated region
    $region9: #{encoder_forward.8} parent=5 // pred_check
      _
    $region10: #{encoder_forward.8} parent=5 // pred_check_branch
      %204 = sbr.rel (%p201) target = $region12
    $region11: #{encoder_forward.8} parent=5 // pred_region
      %s205 = ssub.s32 %s13, 1
      // Predicated region
      $region13: #{encoder_forward.8} parent=11 // pred_check
        %p206 = pneg %p60
      $region14: #{encoder_forward.8} parent=11 // pred_check_branch
        %208 = sbr.rel (%p206) target = $region16
      $region15: #{encoder_forward.8} parent=11 // pred_region
        _
      $region16: #{encoder_forward.8} parent=11 // pred_fallthru
        _
      // Predicated region
      $region17: #{encoder_forward.8} parent=11 // pred_check
        %p209 = pneg %p81
      $region18: #{encoder_forward.8} parent=11 // pred_check_branch
        %211 = sbr.rel (%p209) target = $region20
      $region19: #{encoder_forward.8} parent=11 // pred_region
        _
      $region20: #{encoder_forward.8} parent=11 // pred_fallthru
        _
      // Predicated region
      $region21: #{encoder_forward.8} parent=11 // pred_check
        %p212 = pneg %p102
      $region22: #{encoder_forward.8} parent=11 // pred_check_branch
        %214 = sbr.rel (%p212) target = $region24
      $region23: #{encoder_forward.8} parent=11 // pred_region
        _
      $region24: #{encoder_forward.8} parent=11 // pred_fallthru
        _
      // Predicated region
      $region25: #{encoder_forward.8} parent=11 // pred_check
        %p215 = pneg %p123
      $region26: #{encoder_forward.8} parent=11 // pred_check_branch
        %217 = sbr.rel (%p215) target = $region28
      $region27: #{encoder_forward.8} parent=11 // pred_region
        _
      $region28: #{encoder_forward.8} parent=11 // pred_fallthru
        _
      // Predicated region
      $region29: #{encoder_forward.8} parent=11 // pred_check
        %p218 = pneg %p144
      $region30: #{encoder_forward.8} parent=11 // pred_check_branch
        %220 = sbr.rel (%p218) target = $region32
      $region31: #{encoder_forward.8} parent=11 // pred_region
        _
      $region32: #{encoder_forward.8} parent=11 // pred_fallthru
        _
      // Predicated region
      $region33: #{encoder_forward.8} parent=11 // pred_check
        %p221 = pneg %p165
      $region34: #{encoder_forward.8} parent=11 // pred_check_branch
        %223 = sbr.rel (%p221) target = $region36
      $region35: #{encoder_forward.8} parent=11 // pred_region
        _
      $region36: #{encoder_forward.8} parent=11 // pred_fallthru
        _
    $region12: #{encoder_forward.8} parent=5 // pred_fallthru
      _
    %p224 = scmp.lt.s32.totalorder %s13, 2
    // Predicated region
    $region37: #{encoder_forward.8} parent=5 // pred_check
      %p225 = pneg %p224
    $region38: #{encoder_forward.8} parent=5 // pred_check_branch
      %227 = sbr.rel (%p225) target = $region40
    $region39: #{encoder_forward.8} parent=5 // pred_region
      // Predicated region
      $region41: #{encoder_forward.8} parent=39 // pred_check
        %p228 = pneg %p33
      $region42: #{encoder_forward.8} parent=39 // pred_check_branch
        %230 = sbr.rel (%p228) target = $region44
      $region43: #{encoder_forward.8} parent=39 // pred_region
        %p231 = scmp.lt.s32.totalorder %s13, 1
        %s232 = scalar_select %p231, %s13, 1
        %s233 = smul.addr %s232, 8
        %s234 = scalar_lea.vmem %s0, %s233
      $region44: #{encoder_forward.8} parent=39 // pred_fallthru
        _
    $region40: #{encoder_forward.8} parent=5 // pred_fallthru
      _
    %p235 = scmp.le.s32.totalorder 1, %s13
    %p236 = scmp.lt.s32.totalorder %s13, 3
    %p237 = pnand %p235, %p236
    %p238 = pneg %p237
    // Predicated region
    $region45: #{encoder_forward.8} parent=5 // pred_check
      _
    $region46: #{encoder_forward.8} parent=5 // pred_check_branch
      %240 = sbr.rel (%p237) target = $region48
    $region47: #{encoder_forward.8} parent=5 // pred_region
      %s241 = ssub.s32 %s13, 1
      %p242 = scmp.lt.s32.totalorder %s18, 1
      %s243 = scalar_select %p242, %s18, 1
      %s244 = smul.addr %s243, 8
      %s245 = scalar_lea.vmem %s0, %s244
      %p246 = pneg %p39
      %p247 = pneg %p36
      %p248 = pneg %p60
      %p249 = pneg %p57
      %p250 = pneg %p81
      %p251 = pneg %p78
      %p252 = pneg %p102
      %p253 = pneg %p99
      %p254 = pneg %p123
      %p255 = pneg %p120
      %p256 = pneg %p144
      %p257 = pneg %p141
      %p258 = pneg %p165
      %p259 = pneg %p162
      %p260 = pneg %p191
      %p261 = pneg %p188
      %p262 = scmp.lt.s32.totalorder %s18, 1
      %s263 = scalar_select %p262, %s18, 1
      %s264 = smul.addr %s263, 8
      %s265 = scalar_lea.vmem %s7, %s264
      %p266 = scmp.lt.s32.totalorder %s18, 1
      %s267 = scalar_select %p266, %s18, 1
      %s268 = smul.addr %s267, 8
      %s269 = scalar_lea.vmem %s0, %s268
      %p270 = scmp.lt.s32.totalorder %s18, 1
      %s271 = scalar_select %p270, %s18, 1
      %s272 = smul.addr %s271, 8
      %s273 = scalar_lea.vmem %s7, %s272
      %v275 = vld [vmem:[%s269] sm:$0xff]
      %v276 = vpack.c.bf16 %v275, %v275
      %v277 = vld [vmem:[%s1] sm:$0xf]
      %v278 = vld [vmem:[%s1 + $0x4] sm:$0xf]
      %v279 = vld [vmem:[%s1 + $0x8] sm:$0xf]
      %v280 = vld [vmem:[%s1 + $0xc] sm:$0xf]
      %v281 = vld [vmem:[%s2] sm:$0x1]
      %v283 = vlaneseq
      %v284 = vshrl.u32 %v283, 7
      %v285 = vsub.s32 0, %v284
      %v286 = vrot.slane %v281, %v285
      %v292 = vunpack.c.l.b16 %v277
      %v293 = vunpack.c.l.b16 %v278
      %v294 = vunpack.c.l.b16 %v279
      %v295 = vunpack.c.l.b16 %v280
      %v296 = vpack.c.b16 %v293, %v292
      %v297 = vpack.c.b16 %v295, %v294
      %vm300 = vcmask 261120
      %v302 = vsel %vm300, %v276, 0
      %304 = vmatprep.subr.bf16.mxu0 0
      %305 = vmatpush1.bf16.msra.mxu0 %v296
      %306 = vmatprep.subr.bf16.mxu0 0
      %307 = vmatpush1.bf16.msra.mxu0 %v297
      %308 = vmatprep.subr.bf16.mxu0 0
      %309 = vmatpush1.bf16.msra.mxu0 0
      %310 = vmatprep.subr.bf16.mxu0 0
      %311 = vmatpush1.bf16.msra.mxu0 0
      %312 = vmatprep.subr.bf16.mxu0 0
      %313 = vmatpush1.bf16.msra.mxu0 0
      %314 = vmatprep.subr.bf16.mxu0 0
      %315 = vmatpush1.bf16.msra.mxu0 0
      %316 = vmatprep.subr.bf16.mxu0 0
      %317 = vmatpush1.bf16.msra.mxu0 0
      %318 = vmatprep.subr.bf16.mxu0 0
      %319 = vmatpush1.bf16.msra.mxu0 0
      %320 = vmatprep.subr.bf16.mxu0 0
      %321 = vmatpush1.bf16.msra.mxu0 0
      %322 = vmatprep.subr.bf16.mxu0 0
      %323 = vmatpush1.bf16.msra.mxu0 0
      %324 = vmatprep.subr.bf16.mxu0 0
      %325 = vmatpush1.bf16.msra.mxu0 0
      %326 = vmatprep.subr.bf16.mxu0 0
      %327 = vmatpush1.bf16.msra.mxu0 0
      %328 = vmatprep.subr.bf16.mxu0 0
      %329 = vmatpush1.bf16.msra.mxu0 0
      %330 = vmatprep.subr.bf16.mxu0 0
      %331 = vmatpush1.bf16.msra.mxu0 0
      %332 = vmatprep.subr.bf16.mxu0 0
      %333 = vmatpush1.bf16.msra.mxu0 0
      %334 = vmatprep.subr.bf16.mxu0 0
      %335 = vmatpush1.bf16.msra.mxu0 0
      %336 = vmatprep.mubr.bf16.mxu0 0
      %337 = vmatmul.mubr.bf16.gmra.mrb[0].mxu0 %v302
      %v338 = vpop.f32.mrb[0].mxu0
      %v339 = vadd.f32 %v286, %v338
      %v340 = vpop.f32.mrb[0].mxu0
      %v341 = vpop.f32.mrb[0].mxu0
      %v342 = vpop.f32.mrb[0].mxu0
      %343 = vdwg.mxu0
      %v344 = vmax.f32 %v339, 0.0
      %v345 = vpack.c.bf16 %v344, %v344
      %v346 = vld [vmem:[%s3] sm:$0xf]
      %v347 = vld [vmem:[%s3 + $0x4] sm:$0xf]
      %v348 = vld [vmem:[%s3 + $0x8] sm:$0xf]
      %v349 = vld [vmem:[%s3 + $0xc] sm:$0xf]
      %v350 = vld [vmem:[%s3 + $0x10] sm:$0xf]
      %v351 = vld [vmem:[%s3 + $0x14] sm:$0xf]
      %v352 = vld [vmem:[%s3 + $0x18] sm:$0xf]
      %v353 = vld [vmem:[%s3 + $0x1c] sm:$0xf]
      %v354 = vld [vmem:[%s4] sm:$0x1]
      %v356 = vlaneseq
      %v357 = vshrl.u32 %v356, 7
      %v358 = vsub.s32 0, %v357
      %v359 = vrot.slane %v354, %v358
      %v369 = vunpack.c.l.b16 %v346
      %v370 = vunpack.c.l.b16 %v347
      %v371 = vunpack.c.l.b16 %v348
      %v372 = vunpack.c.l.b16 %v349
      %v373 = vunpack.c.l.b16 %v350
      %v374 = vunpack.c.l.b16 %v351
      %v375 = vunpack.c.l.b16 %v352
      %v376 = vunpack.c.l.b16 %v353
      %v377 = vpack.c.b16 %v370, %v369
      %v378 = vpack.c.b16 %v372, %v371
      %v379 = vpack.c.b16 %v374, %v373
      %v380 = vpack.c.b16 %v376, %v375
      %vm385 = vcmask 523264
      %v387 = vsel %vm385, %v345, 0
      %389 = vmatprep.subr.bf16.mxu0 0
      %390 = vmatpush1.bf16.msra.mxu0 %v377
      %391 = vmatprep.subr.bf16.mxu0 0
      %392 = vmatpush1.bf16.msra.mxu0 %v378
      %393 = vmatprep.subr.bf16.mxu0 0
      %394 = vmatpush1.bf16.msra.mxu0 %v379
      %395 = vmatprep.subr.bf16.mxu0 0
      %396 = vmatpush1.bf16.msra.mxu0 %v380
      %397 = vmatprep.subr.bf16.mxu0 0
      %398 = vmatpush1.bf16.msra.mxu0 0
      %399 = vmatprep.subr.bf16.mxu0 0
      %400 = vmatpush1.bf16.msra.mxu0 0
      %401 = vmatprep.subr.bf16.mxu0 0
      %402 = vmatpush1.bf16.msra.mxu0 0
      %403 = vmatprep.subr.bf16.mxu0 0
      %404 = vmatpush1.bf16.msra.mxu0 0
      %405 = vmatprep.subr.bf16.mxu0 0
      %406 = vmatpush1.bf16.msra.mxu0 0
      %407 = vmatprep.subr.bf16.mxu0 0
      %408 = vmatpush1.bf16.msra.mxu0 0
      %409 = vmatprep.subr.bf16.mxu0 0
      %410 = vmatpush1.bf16.msra.mxu0 0
      %411 = vmatprep.subr.bf16.mxu0 0
      %412 = vmatpush1.bf16.msra.mxu0 0
      %413 = vmatprep.subr.bf16.mxu0 0
      %414 = vmatpush1.bf16.msra.mxu0 0
      %415 = vmatprep.subr.bf16.mxu0 0
      %416 = vmatpush1.bf16.msra.mxu0 0
      %417 = vmatprep.subr.bf16.mxu0 0
      %418 = vmatpush1.bf16.msra.mxu0 0
      %419 = vmatprep.subr.bf16.mxu0 0
      %420 = vmatpush1.bf16.msra.mxu0 0
      %421 = vmatprep.mubr.bf16.mxu0 0
      %422 = vmatmul.mubr.bf16.gmra.mrb[0].mxu0 %v387
      %v423 = vpop.f32.mrb[0].mxu0
      %v424 = vadd.f32 %v359, %v423
      %v425 = vpop.f32.mrb[0].mxu0
      %v426 = vpop.f32.mrb[0].mxu0
      %v427 = vpop.f32.mrb[0].mxu0
      %428 = vdwg.mxu0
      %v429 = vadd.f32 %v424, %v275
      %v430 = vsel %vm300, %v429, 0.0
      %431 = vadd.xlane.f32.xlu0 %v430
      %v432 = vpop.xlane.xlu0 %431
      %v433 = vrcp.pop 32.0
      %v434 = vmul.f32 %v432, %v433
      %v435 = vsub.f32 %v429, %v434
      %v436 = vmul.f32 %v435, %v435
      %v437 = vsel %vm300, %v436, 0.0
      %438 = vadd.xlane.f32.xlu0 %v437
      %v439 = vpop.xlane.xlu0 %438
      %v440 = vmul.f32 %v439, %v433
      %v441 = vadd.f32 %v440, 1e-12
      %v442 = vrsqrt.pop %v441
      %v443 = vmul.f32 %v435, %v442
      %v444 = vld [vmem:[%s5] sm:$0x1]
      %v446 = vlaneseq
      %v447 = vshrl.u32 %v446, 7
      %v448 = vsub.s32 0, %v447
      %v449 = vrot.slane %v444, %v448
      %v451 = vmul.f32 %v443, %v449
      %v452 = vld [vmem:[%s6] sm:$0x1]
      %v454 = vlaneseq
      %v455 = vshrl.u32 %v454, 7
      %v456 = vsub.s32 0, %v455
      %v457 = vrot.slane %v452, %v456
      %v459 = vadd.f32 %v451, %v457
      %460 = vst.msk [vmem:[%s273] sm:$0xff] %vm300, %v459
      %p461 = scmp.lt.s32.totalorder %s18, 1
      %s462 = scalar_select %p461, %s18, 1
      %s463 = smul.addr %s462, 8
      %s464 = scalar_lea.vmem %s7, %s463
      // Predicated region
      $region49: #{encoder_forward.8} parent=47 // pred_check
        %p465 = pneg %p188
      $region50: #{encoder_forward.8} parent=47 // pred_check_branch
        %467 = sbr.rel (%p465) target = $region52
      $region51: #{encoder_forward.8} parent=47 // pred_region
        _
      $region52: #{encoder_forward.8} parent=47 // pred_fallthru
        _
    $region48: #{encoder_forward.8} parent=5 // pred_fallthru
      _
    %p468 = scmp.le.s32.totalorder 2, %s13
    // Predicated region
    $region53: #{encoder_forward.8} parent=5 // pred_check
      %p469 = pneg %p468
    $region54: #{encoder_forward.8} parent=5 // pred_check_branch
      %471 = sbr.rel (%p469) target = $region56
    $region55: #{encoder_forward.8} parent=5 // pred_region
      %s472 = ssub.s32 %s13, 2
      // Predicated region
      $region57: #{encoder_forward.8} parent=55 // pred_check
        %p473 = pneg %p194
      $region58: #{encoder_forward.8} parent=55 // pred_check_branch
        %475 = sbr.rel (%p473) target = $region60
      $region59: #{encoder_forward.8} parent=55 // pred_region
        %p476 = scmp.lt.s32.totalorder %s19, 1
        %s477 = scalar_select %p476, %s19, 1
        %s478 = smul.addr %s477, 8
        %s479 = scalar_lea.vmem %s7, %s478
      $region60: #{encoder_forward.8} parent=55 // pred_fallthru
        _
    $region56: #{encoder_forward.8} parent=5 // pred_fallthru
      _
  $region6: #{encoder_forward.8} parent=0 // loop_footer
    %s17 = sadd.s32 1, %s13
  $region7: #{encoder_forward.8} parent=0 // loop_footer_branch
    %12 = sbr.rel target = $region3
  $region8: #{encoder_forward.8} parent=0 // loop_exit
    _

// kernel: encoder_forward.7
$region0: #{encoder_forward.7}
  #allocation0 [shape = 'u32[]', space=smem, size = 0x4, offset = 0x4, fixed_abs, tag = 'smem constant byte address 0x4 - core index']
  #allocation1 [shape = 'u32[144,128]{1,0:T(1,128)}', space=vmem, size = 0x12000, scoped, tag = 'internal scratch']
  %s0 = inlined_call_operand.vmem [shape: bf16[2,4,8,8], index: 0, kind: input, shape index: {}]
  %s1 = inlined_call_operand.vmem [shape: bf16[2,4,8,8], index: 1, kind: input, shape index: {}]
  %s2 = inlined_call_operand.vmem [shape: bf16[2,4,8,8], index: 2, kind: input, shape index: {}]
  %s3 = inlined_call_operand.vmem [shape: f32[2,1,8], index: 3, kind: input, shape index: {}]
  %s4 = inlined_call_operand.vmem [shape: bf16[4,8,32], index: 4, kind: input, shape index: {}]
  %s5 = inlined_call_operand.vmem [shape: f32[1,32], index: 5, kind: input, shape index: {}]
  %s6 = inlined_call_operand.vmem [shape: f32[2,8,32], index: 6, kind: input, shape index: {}]
  %s7 = inlined_call_operand.vmem [shape: f32[1,32], index: 7, kind: input, shape index: {}]
  %s8 = inlined_call_operand.vmem [shape: f32[1,32], index: 8, kind: input, shape index: {}]
  %s9 = inlined_call_operand.vmem [shape: f32[2,8,32], index: 9, kind: output, shape index: {}]
  %s10 = sld [smem:[#allocation0]]
  $region69: #{encoder_forward.7} parent=0
    _
  %s12 = ssub.s32 1, %s10
  %s13 = scalar_select 0, %s12, %s10
  loop: start=0, step=1, limit=4
  $region2: #{encoder_forward.7} parent=0 // loop_pre_header
    _
  $region3: #{encoder_forward.7} parent=0 // loop_header
    %s15 = sphi 0, %s19
    %p16 = scmp.ge.s32.totalorder %s15, 4
    %s25 = sphi 0, %s27
    %s28 = sphi 0, %s25
    %s29 = sphi 0, %s28
    %s45 = sphi 0, %s29
    %s51 = sphi 0, %s53
    %s54 = sphi 0, %s51
    %s55 = sphi 0, %s54
    %s71 = sphi 0, %s55
    %s77 = sphi 0, %s79
    %s80 = sphi 0, %s77
    %s81 = sphi 0, %s80
    %s97 = sphi 0, %s81
    %s103 = sphi 0, %s105
    %s106 = sphi 0, %s103
    %s107 = sphi 0, %s106
    %s123 = sphi 0, %s107
    %s127 = sphi 0, %s127
    %s129 = sphi 0, %s127
    %s130 = sphi 0, %s129
    %s144 = sphi 0, %s130
    %s148 = sphi 0, %s148
    %s150 = sphi 0, %s148
    %s151 = sphi 0, %s150
    %s165 = sphi 0, %s151
    %s171 = sphi 0, %s173
    %s174 = sphi 0, %s171
    %s175 = sphi 0, %s174
    %s191 = sphi 0, %s175
    %s195 = sphi 0, %s195
    %s197 = sphi 0, %s195
    %s198 = sphi 0, %s197
    %s212 = sphi 0, %s198
    %s216 = sphi 0, %s216
    %s218 = sphi 0, %s216
    %s219 = sphi 0, %s218
    %s233 = sphi 0, %s219
    %s239 = sphi 0, %s241
    %s242 = sphi 0, %s239
    %s243 = sphi 0, %s242
    %s259 = sphi 0, %s243
  $region4: #{encoder_forward.7} parent=0 // loop_header_branch
    %18 = sbr.rel (%p16) target = $region8
  $region5: #{encoder_forward.7} parent=0 // loop_body
    %s20 = ssub.s32 %s15, 1
    %s21 = ssub.s32 %s15, 2
    %s22 = sadd.s32 %s15, 1
    %s23 = ssub.s32 %s15, %s22
    %p24 = scmp.eq.s32.totalorder %s23, 0
    %s26 = sadd.s32 %s25, 1
    %s27 = scalar_select %p24, %s25, %s26
    %p30 = pneg %p24
    %p31 = scmp.eq.s32.totalorder %s15, 1
    %p32 = por %p30, %p31
    %p33 = scmp.ne.s32.totalorder %s25, %s28
    %p34 = scmp.eq.s32.totalorder %s15, 0
    %p35 = por %p33, %p34
    %p36 = scmp.ne.s32.totalorder %s25, %s28
    %p37 = scmp.eq.s32.totalorder %s20, 1
    %p38 = por %p36, %p37
    %p39 = scmp.ne.s32.totalorder %s28, %s29
    %p40 = scmp.eq.s32.totalorder %s20, 0
    %p41 = por %p39, %p40
    %p42 = scmp.ne.s32.totalorder %s28, %s29
    %p43 = scmp.eq.s32.totalorder %s21, 1
    %p44 = por %p42, %p43
    %p46 = scmp.ne.s32.totalorder %s29, %s45
    %p47 = scmp.eq.s32.totalorder %s21, 0
    %p48 = por %p46, %p47
    %s49 = ssub.s32 %s15, %s22
    %p50 = scmp.eq.s32.totalorder %s49, 0
    %s52 = sadd.s32 %s51, 1
    %s53 = scalar_select %p50, %s51, %s52
    %p56 = pneg %p50
    %p57 = scmp.eq.s32.totalorder %s15, 1
    %p58 = por %p56, %p57
    %p59 = scmp.ne.s32.totalorder %s51, %s54
    %p60 = scmp.eq.s32.totalorder %s15, 0
    %p61 = por %p59, %p60
    %p62 = scmp.ne.s32.totalorder %s51, %s54
    %p63 = scmp.eq.s32.totalorder %s20, 1
    %p64 = por %p62, %p63
    %p65 = scmp.ne.s32.totalorder %s54, %s55
    %p66 = scmp.eq.s32.totalorder %s20, 0
    %p67 = por %p65, %p66
    %p68 = scmp.ne.s32.totalorder %s54, %s55
    %p69 = scmp.eq.s32.totalorder %s21, 1
    %p70 = por %p68, %p69
    %p72 = scmp.ne.s32.totalorder %s55, %s71
    %p73 = scmp.eq.s32.totalorder %s21, 0
    %p74 = por %p72, %p73
    %s75 = ssub.s32 %s15, %s22
    %p76 = scmp.eq.s32.totalorder %s75, 0
    %s78 = sadd.s32 %s77, 1
    %s79 = scalar_select %p76, %s77, %s78
    %p82 = pneg %p76
    %p83 = scmp.eq.s32.totalorder %s15, 1
    %p84 = por %p82, %p83
    %p85 = scmp.ne.s32.totalorder %s77, %s80
    %p86 = scmp.eq.s32.totalorder %s15, 0
    %p87 = por %p85, %p86
    %p88 = scmp.ne.s32.totalorder %s77, %s80
    %p89 = scmp.eq.s32.totalorder %s20, 1
    %p90 = por %p88, %p89
    %p91 = scmp.ne.s32.totalorder %s80, %s81
    %p92 = scmp.eq.s32.totalorder %s20, 0
    %p93 = por %p91, %p92
    %p94 = scmp.ne.s32.totalorder %s80, %s81
    %p95 = scmp.eq.s32.totalorder %s21, 1
    %p96 = por %p94, %p95
    %p98 = scmp.ne.s32.totalorder %s81, %s97
    %p99 = scmp.eq.s32.totalorder %s21, 0
    %p100 = por %p98, %p99
    %s101 = ssub.s32 %s15, %s22
    %p102 = scmp.eq.s32.totalorder %s101, 0
    %s104 = sadd.s32 %s103, 1
    %s105 = scalar_select %p102, %s103, %s104
    %p108 = pneg %p102
    %p109 = scmp.eq.s32.totalorder %s15, 1
    %p110 = por %p108, %p109
    %p111 = scmp.ne.s32.totalorder %s103, %s106
    %p112 = scmp.eq.s32.totalorder %s15, 0
    %p113 = por %p111, %p112
    %p114 = scmp.ne.s32.totalorder %s103, %s106
    %p115 = scmp.eq.s32.totalorder %s20, 1
    %p116 = por %p114, %p115
    %p117 = scmp.ne.s32.totalorder %s106, %s107
    %p118 = scmp.eq.s32.totalorder %s20, 0
    %p119 = por %p117, %p118
    %p120 = scmp.ne.s32.totalorder %s106, %s107
    %p121 = scmp.eq.s32.totalorder %s21, 1
    %p122 = por %p120, %p121
    %p124 = scmp.ne.s32.totalorder %s107, %s123
    %p125 = scmp.eq.s32.totalorder %s21, 0
    %p126 = por %p124, %p125
    %s128 = sadd.s32 %s127, 1
    %p131 = scmp.eq.s32.totalorder %s15, 1
    %p132 = scmp.ne.s32.totalorder %s127, %s129
    %p133 = scmp.eq.s32.totalorder %s15, 0
    %p134 = por %p132, %p133
    %p135 = scmp.ne.s32.totalorder %s127, %s129
    %p136 = scmp.eq.s32.totalorder %s20, 1
    %p137 = por %p135, %p136
    %p138 = scmp.ne.s32.totalorder %s129, %s130
    %p139 = scmp.eq.s32.totalorder %s20, 0
    %p140 = por %p138, %p139
    %p141 = scmp.ne.s32.totalorder %s129, %s130
    %p142 = scmp.eq.s32.totalorder %s21, 1
    %p143 = por %p141, %p142
    %p145 = scmp.ne.s32.totalorder %s130, %s144
    %p146 = scmp.eq.s32.totalorder %s21, 0
    %p147 = por %p145, %p146
    %s149 = sadd.s32 %s148, 1
    %p152 = scmp.eq.s32.totalorder %s15, 1
    %p153 = scmp.ne.s32.totalorder %s148, %s150
    %p154 = scmp.eq.s32.totalorder %s15, 0
    %p155 = por %p153, %p154
    %p156 = scmp.ne.s32.totalorder %s148, %s150
    %p157 = scmp.eq.s32.totalorder %s20, 1
    %p158 = por %p156, %p157
    %p159 = scmp.ne.s32.totalorder %s150, %s151
    %p160 = scmp.eq.s32.totalorder %s20, 0
    %p161 = por %p159, %p160
    %p162 = scmp.ne.s32.totalorder %s150, %s151
    %p163 = scmp.eq.s32.totalorder %s21, 1
    %p164 = por %p162, %p163
    %p166 = scmp.ne.s32.totalorder %s151, %s165
    %p167 = scmp.eq.s32.totalorder %s21, 0
    %p168 = por %p166, %p167
    %s169 = ssub.s32 %s15, %s22
    %p170 = scmp.eq.s32.totalorder %s169, 0
    %s172 = sadd.s32 %s171, 1
    %s173 = scalar_select %p170, %s171, %s172
    %p176 = pneg %p170
    %p177 = scmp.eq.s32.totalorder %s15, 1
    %p178 = por %p176, %p177
    %p179 = scmp.ne.s32.totalorder %s171, %s174
    %p180 = scmp.eq.s32.totalorder %s15, 0
    %p181 = por %p179, %p180
    %p182 = scmp.ne.s32.totalorder %s171, %s174
    %p183 = scmp.eq.s32.totalorder %s20, 1
    %p184 = por %p182, %p183
    %p185 = scmp.ne.s32.totalorder %s174, %s175
    %p186 = scmp.eq.s32.totalorder %s20, 0
    %p187 = por %p185, %p186
    %p188 = scmp.ne.s32.totalorder %s174, %s175
    %p189 = scmp.eq.s32.totalorder %s21, 1
    %p190 = por %p188, %p189
    %p192 = scmp.ne.s32.totalorder %s175, %s191
    %p193 = scmp.eq.s32.totalorder %s21, 0
    %p194 = por %p192, %p193
    %s196 = sadd.s32 %s195, 1
    %p199 = scmp.eq.s32.totalorder %s15, 1
    %p200 = scmp.ne.s32.totalorder %s195, %s197
    %p201 = scmp.eq.s32.totalorder %s15, 0
    %p202 = por %p200, %p201
    %p203 = scmp.ne.s32.totalorder %s195, %s197
    %p204 = scmp.eq.s32.totalorder %s20, 1
    %p205 = por %p203, %p204
    %p206 = scmp.ne.s32.totalorder %s197, %s198
    %p207 = scmp.eq.s32.totalorder %s20, 0
    %p208 = por %p206, %p207
    %p209 = scmp.ne.s32.totalorder %s197, %s198
    %p210 = scmp.eq.s32.totalorder %s21, 1
    %p211 = por %p209, %p210
    %p213 = scmp.ne.s32.totalorder %s198, %s212
    %p214 = scmp.eq.s32.totalorder %s21, 0
    %p215 = por %p213, %p214
    %s217 = sadd.s32 %s216, 1
    %p220 = scmp.eq.s32.totalorder %s15, 1
    %p221 = scmp.ne.s32.totalorder %s216, %s218
    %p222 = scmp.eq.s32.totalorder %s15, 0
    %p223 = por %p221, %p222
    %p224 = scmp.ne.s32.totalorder %s216, %s218
    %p225 = scmp.eq.s32.totalorder %s20, 1
    %p226 = por %p224, %p225
    %p227 = scmp.ne.s32.totalorder %s218, %s219
    %p228 = scmp.eq.s32.totalorder %s20, 0
    %p229 = por %p227, %p228
    %p230 = scmp.ne.s32.totalorder %s218, %s219
    %p231 = scmp.eq.s32.totalorder %s21, 1
    %p232 = por %p230, %p231
    %p234 = scmp.ne.s32.totalorder %s219, %s233
    %p235 = scmp.eq.s32.totalorder %s21, 0
    %p236 = por %p234, %p235
    %s237 = ssub.s32 %s15, %s22
    %p238 = scmp.eq.s32.totalorder %s237, 0
    %s240 = sadd.s32 %s239, 1
    %s241 = scalar_select %p238, %s239, %s240
    %p244 = pneg %p238
    %p245 = scmp.eq.s32.totalorder %s15, 1
    %p246 = por %p244, %p245
    %p247 = scmp.ne.s32.totalorder %s239, %s242
    %p248 = scmp.eq.s32.totalorder %s15, 0
    %p249 = por %p247, %p248
    %p250 = scmp.ne.s32.totalorder %s239, %s242
    %p251 = scmp.eq.s32.totalorder %s20, 1
    %p252 = por %p250, %p251
    %p253 = scmp.ne.s32.totalorder %s242, %s243
    %p254 = scmp.eq.s32.totalorder %s20, 0
    %p255 = por %p253, %p254
    %p256 = scmp.ne.s32.totalorder %s242, %s243
    %p257 = scmp.eq.s32.totalorder %s21, 1
    %p258 = por %p256, %p257
    %p260 = scmp.ne.s32.totalorder %s243, %s259
    %p261 = scmp.eq.s32.totalorder %s21, 0
    %p262 = por %p260, %p261
    %p263 = scmp.le.s32.totalorder 1, %s15
    %p264 = scmp.lt.s32.totalorder %s15, 3
    %p265 = pnand %p263, %p264
    %p266 = pneg %p265
    // Predicated region
    $region9: #{encoder_forward.7} parent=5 // pred_check
      _
    $region10: #{encoder_forward.7} parent=5 // pred_check_branch
      %268 = sbr.rel (%p265) target = $region12
    $region11: #{encoder_forward.7} parent=5 // pred_region
      %s269 = ssub.s32 %s15, 1
      // Predicated region
      $region13: #{encoder_forward.7} parent=11 // pred_check
        %p270 = pneg %p140
      $region14: #{encoder_forward.7} parent=11 // pred_check_branch
        %272 = sbr.rel (%p270) target = $region16
      $region15: #{encoder_forward.7} parent=11 // pred_region
        _
      $region16: #{encoder_forward.7} parent=11 // pred_fallthru
        _
      // Predicated region
      $region17: #{encoder_forward.7} parent=11 // pred_check
        %p273 = pneg %p161
      $region18: #{encoder_forward.7} parent=11 // pred_check_branch
        %275 = sbr.rel (%p273) target = $region20
      $region19: #{encoder_forward.7} parent=11 // pred_region
        _
      $region20: #{encoder_forward.7} parent=11 // pred_fallthru
        _
      // Predicated region
      $region21: #{encoder_forward.7} parent=11 // pred_check
        %p276 = pneg %p208
      $region22: #{encoder_forward.7} parent=11 // pred_check_branch
        %278 = sbr.rel (%p276) target = $region24
      $region23: #{encoder_forward.7} parent=11 // pred_region
        _
      $region24: #{encoder_forward.7} parent=11 // pred_fallthru
        _
      // Predicated region
      $region25: #{encoder_forward.7} parent=11 // pred_check
        %p279 = pneg %p229
      $region26: #{encoder_forward.7} parent=11 // pred_check_branch
        %281 = sbr.rel (%p279) target = $region28
      $region27: #{encoder_forward.7} parent=11 // pred_region
        _
      $region28: #{encoder_forward.7} parent=11 // pred_fallthru
        _
    $region12: #{encoder_forward.7} parent=5 // pred_fallthru
      _
    %p282 = scmp.lt.s32.totalorder %s15, 2
    // Predicated region
    $region29: #{encoder_forward.7} parent=5 // pred_check
      %p283 = pneg %p282
    $region30: #{encoder_forward.7} parent=5 // pred_check_branch
      %285 = sbr.rel (%p283) target = $region32
    $region31: #{encoder_forward.7} parent=5 // pred_region
      // Predicated region
      $region33: #{encoder_forward.7} parent=31 // pred_check
        %p286 = pneg %p35
      $region34: #{encoder_forward.7} parent=31 // pred_check_branch
        %288 = sbr.rel (%p286) target = $region36
      $region35: #{encoder_forward.7} parent=31 // pred_region
        %p289 = scmp.lt.s32.totalorder %s15, 1
        %s290 = scalar_select %p289, %s15, 1
        %s291 = smul.addr %s290, 4
        %s292 = smul.addr %s291, 4
        %s293 = scalar_lea.vmem %s0, %s292
      $region36: #{encoder_forward.7} parent=31 // pred_fallthru
        _
      // Predicated region
      $region37: #{encoder_forward.7} parent=31 // pred_check
        %p294 = pneg %p61
      $region38: #{encoder_forward.7} parent=31 // pred_check_branch
        %296 = sbr.rel (%p294) target = $region40
      $region39: #{encoder_forward.7} parent=31 // pred_region
        %p297 = scmp.lt.s32.totalorder %s15, 1
        %s298 = scalar_select %p297, %s15, 1
        %s299 = smul.addr %s298, 4
        %s300 = smul.addr %s299, 4
        %s301 = scalar_lea.vmem %s1, %s300
      $region40: #{encoder_forward.7} parent=31 // pred_fallthru
        _
      // Predicated region
      $region41: #{encoder_forward.7} parent=31 // pred_check
        %p302 = pneg %p87
      $region42: #{encoder_forward.7} parent=31 // pred_check_branch
        %304 = sbr.rel (%p302) target = $region44
      $region43: #{encoder_forward.7} parent=31 // pred_region
        %p305 = scmp.lt.s32.totalorder %s15, 1
        %s306 = scalar_select %p305, %s15, 1
        %s307 = smul.addr %s306, 4
        %s308 = smul.addr %s307, 4
        %s309 = scalar_lea.vmem %s2, %s308
      $region44: #{encoder_forward.7} parent=31 // pred_fallthru
        _
      // Predicated region
      $region45: #{encoder_forward.7} parent=31 // pred_check
        %p310 = pneg %p113
      $region46: #{encoder_forward.7} parent=31 // pred_check_branch
        %312 = sbr.rel (%p310) target = $region48
      $region47: #{encoder_forward.7} parent=31 // pred_region
        %p313 = scmp.lt.s32.totalorder %s15, 1
        %s314 = scalar_select %p313, %s15, 1
        %s315 = scalar_lea.vmem %s3, %s314
      $region48: #{encoder_forward.7} parent=31 // pred_fallthru
        _
      // Predicated region
      $region49: #{encoder_forward.7} parent=31 // pred_check
        %p316 = pneg %p181
      $region50: #{encoder_forward.7} parent=31 // pred_check_branch
        %318 = sbr.rel (%p316) target = $region52
      $region51: #{encoder_forward.7} parent=31 // pred_region
        %p319 = scmp.lt.s32.totalorder %s15, 1
        %s320 = scalar_select %p319, %s15, 1
        %s321 = smul.addr %s320, 8
        %s322 = scalar_lea.vmem %s6, %s321
      $region52: #{encoder_forward.7} parent=31 // pred_fallthru
        _
    $region32: #{encoder_forward.7} parent=5 // pred_fallthru
      _
    %p323 = scmp.le.s32.totalorder 1, %s15
    %p324 = scmp.lt.s32.totalorder %s15, 3
    %p325 = pnand %p323, %p324
    %p326 = pneg %p325
    // Predicated region
    $region53: #{encoder_forward.7} parent=5 // pred_check
      _
    $region54: #{encoder_forward.7} parent=5 // pred_check_branch
      %328 = sbr.rel (%p325) target = $region56
    $region55: #{encoder_forward.7} parent=5 // pred_region
      %s329 = ssub.s32 %s15, 1
      %p330 = scmp.lt.s32.totalorder %s20, 1
      %s331 = scalar_select %p330, %s20, 1
      %s332 = smul.addr %s331, 4
      %s333 = smul.addr %s332, 4
      %s334 = scalar_lea.vmem %s0, %s333
      %p335 = pneg %p41
      %p336 = pneg %p38
      %p337 = scmp.lt.s32.totalorder %s20, 1
      %s338 = scalar_select %p337, %s20, 1
      %s339 = smul.addr %s338, 4
      %s340 = smul.addr %s339, 4
      %s341 = scalar_lea.vmem %s1, %s340
      %p342 = pneg %p67
      %p343 = pneg %p64
      %p344 = scmp.lt.s32.totalorder %s20, 1
      %s345 = scalar_select %p344, %s20, 1
      %s346 = smul.addr %s345, 4
      %s347 = smul.addr %s346, 4
      %s348 = scalar_lea.vmem %s2, %s347
      %p349 = pneg %p93
      %p350 = pneg %p90
      %p351 = scmp.lt.s32.totalorder %s20, 1
      %s352 = scalar_select %p351, %s20, 1
      %s353 = scalar_lea.vmem %s3, %s352
      %p354 = pneg %p119
      %p355 = pneg %p116
      %p356 = pneg %p140
      %p357 = pneg %p137
      %p358 = pneg %p161
      %p359 = pneg %p158
      %p360 = scmp.lt.s32.totalorder %s20, 1
      %s361 = scalar_select %p360, %s20, 1
      %s362 = smul.addr %s361, 8
      %s363 = scalar_lea.vmem %s6, %s362
      %p364 = pneg %p187
      %p365 = pneg %p184
      %p366 = pneg %p208
      %p367 = pneg %p205
      %p368 = pneg %p229
      %p369 = pneg %p226
      %p370 = pneg %p255
      %p371 = pneg %p252
      %p372 = scmp.lt.s32.totalorder %s20, 1
      %s373 = scalar_select %p372, %s20, 1
      %s374 = smul.addr %s373, 8
      %s375 = scalar_lea.vmem %s9, %s374
      %p376 = scmp.lt.s32.totalorder %s20, 1
      %s377 = scalar_select %p376, %s20, 1
      %s378 = smul.addr %s377, 4
      %s379 = smul.addr %s378, 4
      %s380 = scalar_lea.vmem %s0, %s379
      %p381 = scmp.lt.s32.totalorder %s20, 1
      %s382 = scalar_select %p381, %s20, 1
      %s383 = smul.addr %s382, 4
      %s384 = smul.addr %s383, 4
      %s385 = scalar_lea.vmem %s1, %s384
      %p386 = scmp.lt.s32.totalorder %s20, 1
      %s387 = scalar_select %p386, %s20, 1
      %s388 = smul.addr %s387, 4
      %s389 = smul.addr %s388, 4
      %s390 = scalar_lea.vmem %s2, %s389
      %p391 = scmp.lt.s32.totalorder %s20, 1
      %s392 = scalar_select %p391, %s20, 1
      %s393 = scalar_lea.vmem %s3, %s392
      %p394 = scmp.lt.s32.totalorder %s20, 1
      %s395 = scalar_select %p394, %s20, 1
      %s396 = smul.addr %s395, 8
      %s397 = scalar_lea.vmem %s6, %s396
      %p398 = scmp.lt.s32.totalorder %s20, 1
      %s399 = scalar_select %p398, %s20, 1
      %s400 = smul.addr %s399, 8
      %s401 = scalar_lea.vmem %s9, %s400
      %v403 = vld [vmem:[%s380] sm:$0xf]
      %v404 = vld [vmem:[%s380 + $0x4] sm:$0xf]
      %v405 = vld [vmem:[%s380 + $0x8] sm:$0xf]
      %v406 = vld [vmem:[%s380 + $0xc] sm:$0xf]
      %v407 = vld [vmem:[%s385] sm:$0xf]
      %v408 = vld [vmem:[%s385 + $0x4] sm:$0xf]
      %v409 = vld [vmem:[%s385 + $0x8] sm:$0xf]
      %v410 = vld [vmem:[%s385 + $0xc] sm:$0xf]
      %v411 = vld [vmem:[%s390] sm:$0xf]
      %v412 = vld [vmem:[%s390 + $0x4] sm:$0xf]
      %v413 = vld [vmem:[%s390 + $0x8] sm:$0xf]
      %v414 = vld [vmem:[%s390 + $0xc] sm:$0xf]
      %vm415 = vcmask 64512
      %v417 = vsel %vm415, %v403, 0
      %v420 = vsel %vm415, %v407, 0
      %422 = vmatprep.subr.bf16.mxu0 0
      %423 = vmatpush1.bf16.xpose.msra.mxu0 %v420
      %424 = vmatprep.subr.bf16.mxu0 0
      %425 = vmatpush1.bf16.xpose.msra.mxu0 0
      %426 = vmatprep.subr.bf16.mxu0 0
      %427 = vmatpush1.bf16.xpose.msra.mxu0 0
      %428 = vmatprep.subr.bf16.mxu0 0
      %429 = vmatpush1.bf16.xpose.msra.mxu0 0
      %430 = vmatprep.subr.bf16.mxu0 0
      %431 = vmatpush1.bf16.xpose.msra.mxu0 0
      %432 = vmatprep.subr.bf16.mxu0 0
      %433 = vmatpush1.bf16.xpose.msra.mxu0 0
      %434 = vmatprep.subr.bf16.mxu0 0
      %435 = vmatpush1.bf16.xpose.msra.mxu0 0
      %436 = vmatprep.subr.bf16.mxu0 0
      %437 = vmatpush1.bf16.xpose.msra.mxu0 0
      %438 = vmatprep.subr.bf16.mxu0 0
      %439 = vmatpush1.bf16.xpose.msra.mxu0 0
      %440 = vmatprep.subr.bf16.mxu0 0
      %441 = vmatpush1.bf16.xpose.msra.mxu0 0
      %442 = vmatprep.subr.bf16.mxu0 0
      %443 = vmatpush1.bf16.xpose.msra.mxu0 0
      %444 = vmatprep.subr.bf16.mxu0 0
      %445 = vmatpush1.bf16.xpose.msra.mxu0 0
      %446 = vmatprep.subr.bf16.mxu0 0
      %447 = vmatpush1.bf16.xpose.msra.mxu0 0
      %448 = vmatprep.subr.bf16.mxu0 0
      %449 = vmatpush1.bf16.xpose.msra.mxu0 0
      %450 = vmatprep.subr.bf16.mxu0 0
      %451 = vmatpush1.bf16.xpose.msra.mxu0 0
      %452 = vmatprep.subr.bf16.mxu0 0
      %453 = vmatpush1.bf16.xpose.msra.mxu0 0
      %454 = vmatprep.mubr.bf16.mxu0 0
      %455 = vmatmul.mubr.bf16.gmra.mrb[0].mxu0 %v417
      %v456 = vpop.f32.mrb[0].mxu0
      %v457 = vadd.f32 0.0, %v456
      %v458 = vpop.f32.mrb[0].mxu0
      %v459 = vpop.f32.mrb[0].mxu0
      %v460 = vpop.f32.mrb[0].mxu0
      %461 = vdwg.mxu0
      %v463 = vsel %vm415, %v404, 0
      %v466 = vsel %vm415, %v408, 0
      %468 = vmatprep.subr.bf16.mxu0 0
      %469 = vmatpush1.bf16.xpose.msra.mxu0 %v466
      %470 = vmatprep.subr.bf16.mxu0 0
      %471 = vmatpush1.bf16.xpose.msra.mxu0 0
      %472 = vmatprep.subr.bf16.mxu0 0
      %473 = vmatpush1.bf16.xpose.msra.mxu0 0
      %474 = vmatprep.subr.bf16.mxu0 0
      %475 = vmatpush1.bf16.xpose.msra.mxu0 0
      %476 = vmatprep.subr.bf16.mxu0 0
      %477 = vmatpush1.bf16.xpose.msra.mxu0 0
      %478 = vmatprep.subr.bf16.mxu0 0
      %479 = vmatpush1.bf16.xpose.msra.mxu0 0
      %480 = vmatprep.subr.bf16.mxu0 0
      %481 = vmatpush1.bf16.xpose.msra.mxu0 0
      %482 = vmatprep.subr.bf16.mxu0 0
      %483 = vmatpush1.bf16.xpose.msra.mxu0 0
      %484 = vmatprep.subr.bf16.mxu0 0
      %485 = vmatpush1.bf16.xpose.msra.mxu0 0
      %486 = vmatprep.subr.bf16.mxu0 0
      %487 = vmatpush1.bf16.xpose.msra.mxu0 0
      %488 = vmatprep.subr.bf16.mxu0 0
      %489 = vmatpush1.bf16.xpose.msra.mxu0 0
      %490 = vmatprep.subr.bf16.mxu0 0
      %491 = vmatpush1.bf16.xpose.msra.mxu0 0
      %492 = vmatprep.subr.bf16.mxu0 0
      %493 = vmatpush1.bf16.xpose.msra.mxu0 0
      %494 = vmatprep.subr.bf16.mxu0 0
      %495 = vmatpush1.bf16.xpose.msra.mxu0 0
      %496 = vmatprep.subr.bf16.mxu0 0
      %497 = vmatpush1.bf16.xpose.msra.mxu0 0
      %498 = vmatprep.subr.bf16.mxu0 0
      %499 = vmatpush1.bf16.xpose.msra.mxu0 0
      %500 = vmatprep.mubr.bf16.mxu0 0
      %501 = vmatmul.mubr.bf16.gmra.mrb[0].mxu0 %v463
      %v502 = vpop.f32.mrb[0].mxu0
      %v503 = vadd.f32 0.0, %v502
      %v504 = vpop.f32.mrb[0].mxu0
      %v505 = vpop.f32.mrb[0].mxu0
      %v506 = vpop.f32.mrb[0].mxu0
      %507 = vdwg.mxu0
      %v509 = vsel %vm415, %v405, 0
      %v512 = vsel %vm415, %v409, 0
      %514 = vmatprep.subr.bf16.mxu0 0
      %515 = vmatpush1.bf16.xpose.msra.mxu0 %v512
      %516 = vmatprep.subr.bf16.mxu0 0
      %517 = vmatpush1.bf16.xpose.msra.mxu0 0
      %518 = vmatprep.subr.bf16.mxu0 0
      %519 = vmatpush1.bf16.xpose.msra.mxu0 0
      %520 = vmatprep.subr.bf16.mxu0 0
      %521 = vmatpush1.bf16.xpose.msra.mxu0 0
      %522 = vmatprep.subr.bf16.mxu0 0
      %523 = vmatpush1.bf16.xpose.msra.mxu0 0
      %524 = vmatprep.subr.bf16.mxu0 0
      %525 = vmatpush1.bf16.xpose.msra.mxu0 0
      %526 = vmatprep.subr.bf16.mxu0 0
      %527 = vmatpush1.bf16.xpose.msra.mxu0 0
      %528 = vmatprep.subr.bf16.mxu0 0
      %529 = vmatpush1.bf16.xpose.msra.mxu0 0
      %530 = vmatprep.subr.bf16.mxu0 0
      %531 = vmatpush1.bf16.xpose.msra.mxu0 0
      %532 = vmatprep.subr.bf16.mxu0 0
      %533 = vmatpush1.bf16.xpose.msra.mxu0 0
      %534 = vmatprep.subr.bf16.mxu0 0
      %535 = vmatpush1.bf16.xpose.msra.mxu0 0
      %536 = vmatprep.subr.bf16.mxu0 0
      %537 = vmatpush1.bf16.xpose.msra.mxu0 0
      %538 = vmatprep.subr.bf16.mxu0 0
      %539 = vmatpush1.bf16.xpose.msra.mxu0 0
      %540 = vmatprep.subr.bf16.mxu0 0
      %541 = vmatpush1.bf16.xpose.msra.mxu0 0
      %542 = vmatprep.subr.bf16.mxu0 0
      %543 = vmatpush1.bf16.xpose.msra.mxu0 0
      %544 = vmatprep.subr.bf16.mxu0 0
      %545 = vmatpush1.bf16.xpose.msra.mxu0 0
      %546 = vmatprep.mubr.bf16.mxu0 0
      %547 = vmatmul.mubr.bf16.gmra.mrb[0].mxu0 %v509
      %v548 = vpop.f32.mrb[0].mxu0
      %v549 = vadd.f32 0.0, %v548
      %v550 = vpop.f32.mrb[0].mxu0
      %v551 = vpop.f32.mrb[0].mxu0
      %v552 = vpop.f32.mrb[0].mxu0
      %553 = vdwg.mxu0
      %v555 = vsel %vm415, %v406, 0
      %v558 = vsel %vm415, %v410, 0
      %560 = vmatprep.subr.bf16.mxu0 0
      %561 = vmatpush1.bf16.xpose.msra.mxu0 %v558
      %562 = vmatprep.subr.bf16.mxu0 0
      %563 = vmatpush1.bf16.xpose.msra.mxu0 0
      %564 = vmatprep.subr.bf16.mxu0 0
      %565 = vmatpush1.bf16.xpose.msra.mxu0 0
      %566 = vmatprep.subr.bf16.mxu0 0
      %567 = vmatpush1.bf16.xpose.msra.mxu0 0
      %568 = vmatprep.subr.bf16.mxu0 0
      %569 = vmatpush1.bf16.xpose.msra.mxu0 0
      %570 = vmatprep.subr.bf16.mxu0 0
      %571 = vmatpush1.bf16.xpose.msra.mxu0 0
      %572 = vmatprep.subr.bf16.mxu0 0
      %573 = vmatpush1.bf16.xpose.msra.mxu0 0
      %574 = vmatprep.subr.bf16.mxu0 0
      %575 = vmatpush1.bf16.xpose.msra.mxu0 0
      %576 = vmatprep.subr.bf16.mxu0 0
      %577 = vmatpush1.bf16.xpose.msra.mxu0 0
      %578 = vmatprep.subr.bf16.mxu0 0
      %579 = vmatpush1.bf16.xpose.msra.mxu0 0
      %580 = vmatprep.subr.bf16.mxu0 0
      %581 = vmatpush1.bf16.xpose.msra.mxu0 0
      %582 = vmatprep.subr.bf16.mxu0 0
      %583 = vmatpush1.bf16.xpose.msra.mxu0 0
      %584 = vmatprep.subr.bf16.mxu0 0
      %585 = vmatpush1.bf16.xpose.msra.mxu0 0
      %586 = vmatprep.subr.bf16.mxu0 0
      %587 = vmatpush1.bf16.xpose.msra.mxu0 0
      %588 = vmatprep.subr.bf16.mxu0 0
      %589 = vmatpush1.bf16.xpose.msra.mxu0 0
      %590 = vmatprep.subr.bf16.mxu0 0
      %591 = vmatpush1.bf16.xpose.msra.mxu0 0
      %592 = vmatprep.mubr.bf16.mxu0 0
      %593 = vmatmul.mubr.bf16.gmra.mrb[0].mxu0 %v555
      %v594 = vpop.f32.mrb[0].mxu0
      %v595 = vadd.f32 0.0, %v594
      %v596 = vpop.f32.mrb[0].mxu0
      %v597 = vpop.f32.mrb[0].mxu0
      %v598 = vpop.f32.mrb[0].mxu0
      %599 = vdwg.mxu0
      %v600 = vmul.f32 %v457, 0.35355338
      %v601 = vmul.f32 %v503, 0.35355338
      %v602 = vmul.f32 %v549, 0.35355338
      %v603 = vmul.f32 %v595, 0.35355338
      %v604 = vld [vmem:[%s393] sm:$0x1]
      %v606 = vlaneseq
      %v607 = vshrl.u32 %v606, 7
      %v608 = vsub.s32 0, %v607
      %v609 = vrot.slane %v604, %v608
      %vm611 = vcmp.eq.f32.partialorder %v609, 0.0
      %v612 = vsel %vm611, -10000.0, %v600
      %v613 = vsel %vm611, -10000.0, %v601
      %v614 = vsel %vm611, -10000.0, %v602
      %v615 = vsel %vm611, -10000.0, %v603
      %v616 = vsel %vm415, %v612, -inf
      %617 = vmax.xlane.f32.xlu0 %v616
      %v618 = vpop.xlane.xlu0 %617
      %v619 = vsel %vm415, %v613, -inf
      %620 = vmax.xlane.f32.xlu0 %v619
      %v621 = vpop.xlane.xlu0 %620
      %v622 = vsel %vm415, %v614, -inf
      %623 = vmax.xlane.f32.xlu0 %v622
      %v624 = vpop.xlane.xlu0 %623
      %v625 = vsel %vm415, %v615, -inf
      %626 = vmax.xlane.f32.xlu0 %v625
      %v627 = vpop.xlane.xlu0 %626
      %v628 = vsub.f32 %v612, %v618
      %v629 = vsub.f32 %v613, %v621
      %v630 = vsub.f32 %v614, %v624
      %v631 = vsub.f32 %v615, %v627
      %v632 = vmul.f32 %v628, 1.442695
      %v633 = vpow.pop %v632
      %v634 = vmul.f32 %v629, 1.442695
      %v635 = vpow.pop %v634
      %v636 = vmul.f32 %v630, 1.442695
      %v637 = vpow.pop %v636
      %v638 = vmul.f32 %v631, 1.442695
      %v639 = vpow.pop %v638
      %v640 = vsel %vm415, %v633, 0.0
      %641 = vadd.xlane.f32.xlu0 %v640
      %v642 = vpop.xlane.xlu0 %641
      %v643 = vsel %vm415, %v635, 0.0
      %644 = vadd.xlane.f32.xlu0 %v643
      %v645 = vpop.xlane.xlu0 %644
      %v646 = vsel %vm415, %v637, 0.0
      %647 = vadd.xlane.f32.xlu0 %v646
      %v648 = vpop.xlane.xlu0 %647
      %v649 = vsel %vm415, %v639, 0.0
      %650 = vadd.xlane.f32.xlu0 %v649
      %v651 = vpop.xlane.xlu0 %650
      %v652 = vrcp.pop %v642
      %v653 = vrcp.pop %v645
      %v654 = vrcp.pop %v648
      %v655 = vrcp.pop %v651
      %v656 = vmul.f32 %v633, %v652
      %v657 = vmul.f32 %v635, %v653
      %v658 = vmul.f32 %v637, %v654
      %v659 = vmul.f32 %v639, %v655
      %v660 = vpack.c.bf16 %v656, %v656
      %v661 = vpack.c.bf16 %v657, %v657
      %v662 = vpack.c.bf16 %v658, %v658
      %v663 = vpack.c.bf16 %v659, %v659
      %v665 = vsel %vm415, %v660, 0
      %vm667 = vcmask 1043456
      %v669 = vsel %vm667, %v411, 0
      %671 = vmatprep.subr.bf16.mxu0 0
      %672 = vmatpush1.bf16.msra.mxu0 %v669
      %673 = vmatprep.subr.bf16.mxu0 0
      %674 = vmatpush1.bf16.msra.mxu0 0
      %675 = vmatprep.subr.bf16.mxu0 0
      %676 = vmatpush1.bf16.msra.mxu0 0
      %677 = vmatprep.subr.bf16.mxu0 0
      %678 = vmatpush1.bf16.msra.mxu0 0
      %679 = vmatprep.subr.bf16.mxu0 0
      %680 = vmatpush1.bf16.msra.mxu0 0
      %681 = vmatprep.subr.bf16.mxu0 0
      %682 = vmatpush1.bf16.msra.mxu0 0
      %683 = vmatprep.subr.bf16.mxu0 0
      %684 = vmatpush1.bf16.msra.mxu0 0
      %685 = vmatprep.subr.bf16.mxu0 0
      %686 = vmatpush1.bf16.msra.mxu0 0
      %687 = vmatprep.subr.bf16.mxu0 0
      %688 = vmatpush1.bf16.msra.mxu0 0
      %689 = vmatprep.subr.bf16.mxu0 0
      %690 = vmatpush1.bf16.msra.mxu0 0
      %691 = vmatprep.subr.bf16.mxu0 0
      %692 = vmatpush1.bf16.msra.mxu0 0
      %693 = vmatprep.subr.bf16.mxu0 0
      %694 = vmatpush1.bf16.msra.mxu0 0
      %695 = vmatprep.subr.bf16.mxu0 0
      %696 = vmatpush1.bf16.msra.mxu0 0
      %697 = vmatprep.subr.bf16.mxu0 0
      %698 = vmatpush1.bf16.msra.mxu0 0
      %699 = vmatprep.subr.bf16.mxu0 0
      %700 = vmatpush1.bf16.msra.mxu0 0
      %701 = vmatprep.subr.bf16.mxu0 0
      %702 = vmatpush1.bf16.msra.mxu0 0
      %703 = vmatprep.mubr.bf16.mxu0 0
      %704 = vmatmul.mubr.bf16.gmra.mrb[0].mxu0 %v665
      %v705 = vpop.f32.mrb[0].mxu0
      %v706 = vadd.f32 0.0, %v705
      %v707 = vpop.f32.mrb[0].mxu0
      %v708 = vpop.f32.mrb[0].mxu0
      %v709 = vpop.f32.mrb[0].mxu0
      %710 = vdwg.mxu0
      %v712 = vsel %vm415, %v661, 0
      %v715 = vsel %vm667, %v412, 0
      %717 = vmatprep.subr.bf16.mxu0 0
      %718 = vmatpush1.bf16.msra.mxu0 %v715
      %719 = vmatprep.subr.bf16.mxu0 0
      %720 = vmatpush1.bf16.msra.mxu0 0
      %721 = vmatprep.subr.bf16.mxu0 0
      %722 = vmatpush1.bf16.msra.mxu0 0
      %723 = vmatprep.subr.bf16.mxu0 0
      %724 = vmatpush1.bf16.msra.mxu0 0
      %725 = vmatprep.subr.bf16.mxu0 0
      %726 = vmatpush1.bf16.msra.mxu0 0
      %727 = vmatprep.subr.bf16.mxu0 0
      %728 = vmatpush1.bf16.msra.mxu0 0
      %729 = vmatprep.subr.bf16.mxu0 0
      %730 = vmatpush1.bf16.msra.mxu0 0
      %731 = vmatprep.subr.bf16.mxu0 0
      %732 = vmatpush1.bf16.msra.mxu0 0
      %733 = vmatprep.subr.bf16.mxu0 0
      %734 = vmatpush1.bf16.msra.mxu0 0
      %735 = vmatprep.subr.bf16.mxu0 0
      %736 = vmatpush1.bf16.msra.mxu0 0
      %737 = vmatprep.subr.bf16.mxu0 0
      %738 = vmatpush1.bf16.msra.mxu0 0
      %739 = vmatprep.subr.bf16.mxu0 0
      %740 = vmatpush1.bf16.msra.mxu0 0
      %741 = vmatprep.subr.bf16.mxu0 0
      %742 = vmatpush1.bf16.msra.mxu0 0
      %743 = vmatprep.subr.bf16.mxu0 0
      %744 = vmatpush1.bf16.msra.mxu0 0
      %745 = vmatprep.subr.bf16.mxu0 0
      %746 = vmatpush1.bf16.msra.mxu0 0
      %747 = vmatprep.subr.bf16.mxu0 0
      %748 = vmatpush1.bf16.msra.mxu0 0
      %749 = vmatprep.mubr.bf16.mxu0 0
      %750 = vmatmul.mubr.bf16.gmra.mrb[0].mxu0 %v712
      %v751 = vpop.f32.mrb[0].mxu0
      %v752 = vadd.f32 0.0, %v751
      %v753 = vpop.f32.mrb[0].mxu0
      %v754 = vpop.f32.mrb[0].mxu0
      %v755 = vpop.f32.mrb[0].mxu0
      %756 = vdwg.mxu0
      %v758 = vsel %vm415, %v662, 0
      %v761 = vsel %vm667, %v413, 0
      %763 = vmatprep.subr.bf16.mxu0 0
      %764 = vmatpush1.bf16.msra.mxu0 %v761
      %765 = vmatprep.subr.bf16.mxu0 0
      %766 = vmatpush1.bf16.msra.mxu0 0
      %767 = vmatprep.subr.bf16.mxu0 0
      %768 = vmatpush1.bf16.msra.mxu0 0
      %769 = vmatprep.subr.bf16.mxu0 0
      %770 = vmatpush1.bf16.msra.mxu0 0
      %771 = vmatprep.subr.bf16.mxu0 0
      %772 = vmatpush1.bf16.msra.mxu0 0
      %773 = vmatprep.subr.bf16.mxu0 0
      %774 = vmatpush1.bf16.msra.mxu0 0
      %775 = vmatprep.subr.bf16.mxu0 0
      %776 = vmatpush1.bf16.msra.mxu0 0
      %777 = vmatprep.subr.bf16.mxu0 0
      %778 = vmatpush1.bf16.msra.mxu0 0
      %779 = vmatprep.subr.bf16.mxu0 0
      %780 = vmatpush1.bf16.msra.mxu0 0
      %781 = vmatprep.subr.bf16.mxu0 0
      %782 = vmatpush1.bf16.msra.mxu0 0
      %783 = vmatprep.subr.bf16.mxu0 0
      %784 = vmatpush1.bf16.msra.mxu0 0
      %785 = vmatprep.subr.bf16.mxu0 0
      %786 = vmatpush1.bf16.msra.mxu0 0
      %787 = vmatprep.subr.bf16.mxu0 0
      %788 = vmatpush1.bf16.msra.mxu0 0
      %789 = vmatprep.subr.bf16.mxu0 0
      %790 = vmatpush1.bf16.msra.mxu0 0
      %791 = vmatprep.subr.bf16.mxu0 0
      %792 = vmatpush1.bf16.msra.mxu0 0
      %793 = vmatprep.subr.bf16.mxu0 0
      %794 = vmatpush1.bf16.msra.mxu0 0
      %795 = vmatprep.mubr.bf16.mxu0 0
      %796 = vmatmul.mubr.bf16.gmra.mrb[0].mxu0 %v758
      %v797 = vpop.f32.mrb[0].mxu0
      %v798 = vadd.f32 0.0, %v797
      %v799 = vpop.f32.mrb[0].mxu0
      %v800 = vpop.f32.mrb[0].mxu0
      %v801 = vpop.f32.mrb[0].mxu0
      %802 = vdwg.mxu0
      %v804 = vsel %vm415, %v663, 0
      %v807 = vsel %vm667, %v414, 0
      %809 = vmatprep.subr.bf16.mxu0 0
      %810 = vmatpush1.bf16.msra.mxu0 %v807
      %811 = vmatprep.subr.bf16.mxu0 0
      %812 = vmatpush1.bf16.msra.mxu0 0
      %813 = vmatprep.subr.bf16.mxu0 0
      %814 = vmatpush1.bf16.msra.mxu0 0
      %815 = vmatprep.subr.bf16.mxu0 0
      %816 = vmatpush1.bf16.msra.mxu0 0
      %817 = vmatprep.subr.bf16.mxu0 0
      %818 = vmatpush1.bf16.msra.mxu0 0
      %819 = vmatprep.subr.bf16.mxu0 0
      %820 = vmatpush1.bf16.msra.mxu0 0
      %821 = vmatprep.subr.bf16.mxu0 0
      %822 = vmatpush1.bf16.msra.mxu0 0
      %823 = vmatprep.subr.bf16.mxu0 0
      %824 = vmatpush1.bf16.msra.mxu0 0
      %825 = vmatprep.subr.bf16.mxu0 0
      %826 = vmatpush1.bf16.msra.mxu0 0
      %827 = vmatprep.subr.bf16.mxu0 0
      %828 = vmatpush1.bf16.msra.mxu0 0
      %829 = vmatprep.subr.bf16.mxu0 0
      %830 = vmatpush1.bf16.msra.mxu0 0
      %831 = vmatprep.subr.bf16.mxu0 0
      %832 = vmatpush1.bf16.msra.mxu0 0
      %833 = vmatprep.subr.bf16.mxu0 0
      %834 = vmatpush1.bf16.msra.mxu0 0
      %835 = vmatprep.subr.bf16.mxu0 0
      %836 = vmatpush1.bf16.msra.mxu0 0
      %837 = vmatprep.subr.bf16.mxu0 0
      %838 = vmatpush1.bf16.msra.mxu0 0
      %839 = vmatprep.subr.bf16.mxu0 0
      %840 = vmatpush1.bf16.msra.mxu0 0
      %841 = vmatprep.mubr.bf16.mxu0 0
      %842 = vmatmul.mubr.bf16.gmra.mrb[0].mxu0 %v804
      %v843 = vpop.f32.mrb[0].mxu0
      %v844 = vadd.f32 0.0, %v843
      %v845 = vpop.f32.mrb[0].mxu0
      %v846 = vpop.f32.mrb[0].mxu0
      %v847 = vpop.f32.mrb[0].mxu0
      %848 = vdwg.mxu0
      %v849 = vpack.c.bf16 %v706, %v706
      %v850 = vpack.c.bf16 %v752, %v752
      %v851 = vpack.c.bf16 %v798, %v798
      %v852 = vpack.c.bf16 %v844, %v844
      %v853 = vld [vmem:[%s4] sm:$0xf]
      %v854 = vld [vmem:[%s4 + $0x4] sm:$0xf]
      %v855 = vld [vmem:[%s4 + $0x8] sm:$0xf]
      %v856 = vld [vmem:[%s4 + $0xc] sm:$0xf]
      %v858 = vsel %vm415, %v849, 0
      %v861 = vsel %vm667, %v853, 0
      %863 = vmatprep.subr.bf16.mxu0 0
      %864 = vmatpush1.bf16.msra.mxu0 %v861
      %865 = vmatprep.subr.bf16.mxu0 0
      %866 = vmatpush1.bf16.msra.mxu0 0
      %867 = vmatprep.subr.bf16.mxu0 0
      %868 = vmatpush1.bf16.msra.mxu0 0
      %869 = vmatprep.subr.bf16.mxu0 0
      %870 = vmatpush1.bf16.msra.mxu0 0
      %871 = vmatprep.subr.bf16.mxu0 0
      %872 = vmatpush1.bf16.msra.mxu0 0
      %873 = vmatprep.subr.bf16.mxu0 0
      %874 = vmatpush1.bf16.msra.mxu0 0
      %875 = vmatprep.subr.bf16.mxu0 0
      %876 = vmatpush1.bf16.msra.mxu0 0
      %877 = vmatprep.subr.bf16.mxu0 0
      %878 = vmatpush1.bf16.msra.mxu0 0
      %879 = vmatprep.subr.bf16.mxu0 0
      %880 = vmatpush1.bf16.msra.mxu0 0
      %881 = vmatprep.subr.bf16.mxu0 0
      %882 = vmatpush1.bf16.msra.mxu0 0
      %883 = vmatprep.subr.bf16.mxu0 0
      %884 = vmatpush1.bf16.msra.mxu0 0
      %885 = vmatprep.subr.bf16.mxu0 0
      %886 = vmatpush1.bf16.msra.mxu0 0
      %887 = vmatprep.subr.bf16.mxu0 0
      %888 = vmatpush1.bf16.msra.mxu0 0
      %889 = vmatprep.subr.bf16.mxu0 0
      %890 = vmatpush1.bf16.msra.mxu0 0
      %891 = vmatprep.subr.bf16.mxu0 0
      %892 = vmatpush1.bf16.msra.mxu0 0
      %893 = vmatprep.subr.bf16.mxu0 0
      %894 = vmatpush1.bf16.msra.mxu0 0
      %895 = vmatprep.mubr.bf16.mxu0 0
      %896 = vmatmul.mubr.bf16.gmra.mrb[0].mxu0 %v858
      %v897 = vpop.f32.mrb[0].mxu0
      %v898 = vadd.f32 0.0, %v897
      %v899 = vpop.f32.mrb[0].mxu0
      %v900 = vpop.f32.mrb[0].mxu0
      %v901 = vpop.f32.mrb[0].mxu0
      %902 = vdwg.mxu0
      %v904 = vsel %vm415, %v850, 0
      %v907 = vsel %vm667, %v854, 0
      %909 = vmatprep.subr.bf16.mxu0 0
      %910 = vmatpush1.bf16.msra.mxu0 %v907
      %911 = vmatprep.subr.bf16.mxu0 0
      %912 = vmatpush1.bf16.msra.mxu0 0
      %913 = vmatprep.subr.bf16.mxu0 0
      %914 = vmatpush1.bf16.msra.mxu0 0
      %915 = vmatprep.subr.bf16.mxu0 0
      %916 = vmatpush1.bf16.msra.mxu0 0
      %917 = vmatprep.subr.bf16.mxu0 0
      %918 = vmatpush1.bf16.msra.mxu0 0
      %919 = vmatprep.subr.bf16.mxu0 0
      %920 = vmatpush1.bf16.msra.mxu0 0
      %921 = vmatprep.subr.bf16.mxu0 0
      %922 = vmatpush1.bf16.msra.mxu0 0
      %923 = vmatprep.subr.bf16.mxu0 0
      %924 = vmatpush1.bf16.msra.mxu0 0
      %925 = vmatprep.subr.bf16.mxu0 0
      %926 = vmatpush1.bf16.msra.mxu0 0
      %927 = vmatprep.subr.bf16.mxu0 0
      %928 = vmatpush1.bf16.msra.mxu0 0
      %929 = vmatprep.subr.bf16.mxu0 0
      %930 = vmatpush1.bf16.msra.mxu0 0
      %931 = vmatprep.subr.bf16.mxu0 0
      %932 = vmatpush1.bf16.msra.mxu0 0
      %933 = vmatprep.subr.bf16.mxu0 0
      %934 = vmatpush1.bf16.msra.mxu0 0
      %935 = vmatprep.subr.bf16.mxu0 0
      %936 = vmatpush1.bf16.msra.mxu0 0
      %937 = vmatprep.subr.bf16.mxu0 0
      %938 = vmatpush1.bf16.msra.mxu0 0
      %939 = vmatprep.subr.bf16.mxu0 0
      %940 = vmatpush1.bf16.msra.mxu0 0
      %941 = vmatprep.mubr.bf16.mxu0 0
      %942 = vmatmul.mubr.bf16.gmra.mrb[0].mxu0 %v904
      %v943 = vpop.f32.mrb[0].mxu0
      %v944 = vadd.f32 0.0, %v943
      %v945 = vpop.f32.mrb[0].mxu0
      %v946 = vpop.f32.mrb[0].mxu0
      %v947 = vpop.f32.mrb[0].mxu0
      %948 = vdwg.mxu0
      %v950 = vsel %vm415, %v851, 0
      %v953 = vsel %vm667, %v855, 0
      %955 = vmatprep.subr.bf16.mxu0 0
      %956 = vmatpush1.bf16.msra.mxu0 %v953
      %957 = vmatprep.subr.bf16.mxu0 0
      %958 = vmatpush1.bf16.msra.mxu0 0
      %959 = vmatprep.subr.bf16.mxu0 0
      %960 = vmatpush1.bf16.msra.mxu0 0
      %961 = vmatprep.subr.bf16.mxu0 0
      %962 = vmatpush1.bf16.msra.mxu0 0
      %963 = vmatprep.subr.bf16.mxu0 0
      %964 = vmatpush1.bf16.msra.mxu0 0
      %965 = vmatprep.subr.bf16.mxu0 0
      %966 = vmatpush1.bf16.msra.mxu0 0
      %967 = vmatprep.subr.bf16.mxu0 0
      %968 = vmatpush1.bf16.msra.mxu0 0
      %969 = vmatprep.subr.bf16.mxu0 0
      %970 = vmatpush1.bf16.msra.mxu0 0
      %971 = vmatprep.subr.bf16.mxu0 0
      %972 = vmatpush1.bf16.msra.mxu0 0
      %973 = vmatprep.subr.bf16.mxu0 0
      %974 = vmatpush1.bf16.msra.mxu0 0
      %975 = vmatprep.subr.bf16.mxu0 0
      %976 = vmatpush1.bf16.msra.mxu0 0
      %977 = vmatprep.subr.bf16.mxu0 0
      %978 = vmatpush1.bf16.msra.mxu0 0
      %979 = vmatprep.subr.bf16.mxu0 0
      %980 = vmatpush1.bf16.msra.mxu0 0
      %981 = vmatprep.subr.bf16.mxu0 0
      %982 = vmatpush1.bf16.msra.mxu0 0
      %983 = vmatprep.subr.bf16.mxu0 0
      %984 = vmatpush1.bf16.msra.mxu0 0
      %985 = vmatprep.subr.bf16.mxu0 0
      %986 = vmatpush1.bf16.msra.mxu0 0
      %987 = vmatprep.mubr.bf16.mxu0 0
      %988 = vmatmul.mubr.bf16.gmra.mrb[0].mxu0 %v950
      %v989 = vpop.f32.mrb[0].mxu0
      %v990 = vadd.f32 0.0, %v989
      %v991 = vpop.f32.mrb[0].mxu0
      %v992 = vpop.f32.mrb[0].mxu0
      %v993 = vpop.f32.mrb[0].mxu0
      %994 = vdwg.mxu0
      %v996 = vsel %vm415, %v852, 0
      %v999 = vsel %vm667, %v856, 0
      %1001 = vmatprep.subr.bf16.mxu0 0
      %1002 = vmatpush1.bf16.msra.mxu0 %v999
      %1003 = vmatprep.subr.bf16.mxu0 0
      %1004 = vmatpush1.bf16.msra.mxu0 0
      %1005 = vmatprep.subr.bf16.mxu0 0
      %1006 = vmatpush1.bf16.msra.mxu0 0
      %1007 = vmatprep.subr.bf16.mxu0 0
      %1008 = vmatpush1.bf16.msra.mxu0 0
      %1009 = vmatprep.subr.bf16.mxu0 0
      %1010 = vmatpush1.bf16.msra.mxu0 0
      %1011 = vmatprep.subr.bf16.mxu0 0
      %1012 = vmatpush1.bf16.msra.mxu0 0
      %1013 = vmatprep.subr.bf16.mxu0 0
      %1014 = vmatpush1.bf16.msra.mxu0 0
      %1015 = vmatprep.subr.bf16.mxu0 0
      %1016 = vmatpush1.bf16.msra.mxu0 0
      %1017 = vmatprep.subr.bf16.mxu0 0
      %1018 = vmatpush1.bf16.msra.mxu0 0
      %1019 = vmatprep.subr.bf16.mxu0 0
      %1020 = vmatpush1.bf16.msra.mxu0 0
      %1021 = vmatprep.subr.bf16.mxu0 0
      %1022 = vmatpush1.bf16.msra.mxu0 0
      %1023 = vmatprep.subr.bf16.mxu0 0
      %1024 = vmatpush1.bf16.msra.mxu0 0
      %1025 = vmatprep.subr.bf16.mxu0 0
      %1026 = vmatpush1.bf16.msra.mxu0 0
      %1027 = vmatprep.subr.bf16.mxu0 0
      %1028 = vmatpush1.bf16.msra.mxu0 0
      %1029 = vmatprep.subr.bf16.mxu0 0
      %1030 = vmatpush1.bf16.msra.mxu0 0
      %1031 = vmatprep.subr.bf16.mxu0 0
      %1032 = vmatpush1.bf16.msra.mxu0 0
      %1033 = vmatprep.mubr.bf16.mxu0 0
      %1034 = vmatmul.mubr.bf16.gmra.mrb[0].mxu0 %v996
      %v1035 = vpop.f32.mrb[0].mxu0
      %v1036 = vadd.f32 0.0, %v1035
      %v1037 = vpop.f32.mrb[0].mxu0
      %v1038 = vpop.f32.mrb[0].mxu0
      %v1039 = vpop.f32.mrb[0].mxu0
      %1040 = vdwg.mxu0
      %vm1041 = vcmask 261120
      %v1042 = vsel %vm1041, %v898, 0.0
      %v1043 = vsel %vm1041, %v944, 0.0
      %v1044 = vadd.f32 %v1042, %v1043
      %v1045 = vsel %vm1041, %v990, 0.0
      %v1046 = vadd.f32 %v1044, %v1045
      %v1047 = vsel %vm1041, %v1036, 0.0
      %v1048 = vadd.f32 %v1046, %v1047
      %v1049 = vld [vmem:[%s5] sm:$0x1]
      %v1051 = vlaneseq
      %v1052 = vshrl.u32 %v1051, 7
      %v1053 = vsub.s32 0, %v1052
      %v1054 = vrot.slane %v1049, %v1053
      %v1056 = vadd.f32 %v1048, %v1054
      %v1057 = vld [vmem:[%s397] sm:$0xff]
      %v1058 = vadd.f32 %v1056, %v1057
      %v1059 = vsel %vm1041, %v1058, 0.0
      %1060 = vadd.xlane.f32.xlu0 %v1059
      %v1061 = vpop.xlane.xlu0 %1060
      %v1062 = vrcp.pop 32.0
      %v1063 = vmul.f32 %v1061, %v1062
      %v1064 = vsub.f32 %v1058, %v1063
      %v1065 = vmul.f32 %v1064, %v1064
      %v1066 = vsel %vm1041, %v1065, 0.0
      %1067 = vadd.xlane.f32.xlu0 %v1066
      %v1068 = vpop.xlane.xlu0 %1067
      %v1069 = vmul.f32 %v1068, %v1062
      %v1070 = vadd.f32 %v1069, 1e-12
      %v1071 = vrsqrt.pop %v1070
      %v1072 = vmul.f32 %v1064, %v1071
      %v1073 = vld [vmem:[%s7] sm:$0x1]
      %v1075 = vlaneseq
      %v1076 = vshrl.u32 %v1075, 7
      %v1077 = vsub.s32 0, %v1076
      %v1078 = vrot.slane %v1073, %v1077
      %v1080 = vmul.f32 %v1072, %v1078
      %v1081 = vld [vmem:[%s8] sm:$0x1]
      %v1083 = vlaneseq
      %v1084 = vshrl.u32 %v1083, 7
      %v1085 = vsub.s32 0, %v1084
      %v1086 = vrot.slane %v1081, %v1085
      %v1088 = vadd.f32 %v1080, %v1086
      %1089 = vst.msk [vmem:[%s401] sm:$0xff] %vm1041, %v1088
      %p1090 = scmp.lt.s32.totalorder %s20, 1
      %s1091 = scalar_select %p1090, %s20, 1
      %s1092 = smul.addr %s1091, 8
      %s1093 = scalar_lea.vmem %s9, %s1092
      // Predicated region
      $region57: #{encoder_forward.7} parent=55 // pred_check
        %p1094 = pneg %p252
      $region58: #{encoder_forward.7} parent=55 // pred_check_branch
        %1096 = sbr.rel (%p1094) target = $region60
      $region59: #{encoder_forward.7} parent=55 // pred_region
        _
      $region60: #{encoder_forward.7} parent=55 // pred_fallthru
        _
    $region56: #{encoder_forward.7} parent=5 // pred_fallthru
      _
    %p1097 = scmp.le.s32.totalorder 2, %s15
    // Predicated region
    $region61: #{encoder_forward.7} parent=5 // pred_check
      %p1098 = pneg %p1097
    $region62: #{encoder_forward.7} parent=5 // pred_check_branch
      %1100 = sbr.rel (%p1098) target = $region64
    $region63: #{encoder_forward.7} parent=5 // pred_region
      %s1101 = ssub.s32 %s15, 2
      // Predicated region
      $region65: #{encoder_forward.7} parent=63 // pred_check
        %p1102 = pneg %p258
      $region66: #{encoder_forward.7} parent=63 // pred_check_branch
        %1104 = sbr.rel (%p1102) target = $region68
      $region67: #{encoder_forward.7} parent=63 // pred_region
        %p1105 = scmp.lt.s32.totalorder %s21, 1
        %s1106 = scalar_select %p1105, %s21, 1
        %s1107 = smul.addr %s1106, 8
        %s1108 = scalar_lea.vmem %s9, %s1107
      $region68: #{encoder_forward.7} parent=63 // pred_fallthru
        _
    $region64: #{encoder_forward.7} parent=5 // pred_fallthru
      _
  $region6: #{encoder_forward.7} parent=0 // loop_footer
    %s19 = sadd.s32 1, %s15
  $region7: #{encoder_forward.7} parent=0 // loop_footer_branch
    %14 = sbr.rel target = $region3
  $region8: #{encoder_forward.7} parent=0 // loop_exit
    _

</llo_original>
